<compile_context>
chip_gen: v7x
topology: tpu7x:2x2x1
jax: 0.10.0
libtpu: 0.0.40
codegen_flags: <defaults>
</compile_context>

<pallas_src>
import functools

import jax
import jax.numpy as jnp
from jax import lax
from jax.experimental import pallas as pl
from jax.experimental.pallas import tpu as pltpu


def _round_up(v, m):
    return ((v + m - 1) // m) * m


def _attn_pool_kernel(nv_ref, x_ref, wvu_ref, bvu_ref, wwT_ref, bw_ref,
                      m_ref, l_ref, acc_ref, *, d_hidden, tile_n, blocks_per_split):
    c = pl.program_id(0)                      # split ("parallel") axis
    j = pl.program_id(1)                      # instance-tile ("arbitrary") axis
    nv = nv_ref[0]                            # true bag length (SMEM scalar)
    start = (c * blocks_per_split + j) * tile_n   # unclamped global row offset

    # Per-split online-softmax state lives directly in the output blocks
    # (constant block index along j => VMEM-resident accumulators).
    @pl.when(j == 0)
    def _init():
        m_ref[...] = jnp.full(m_ref.shape, -jnp.inf, dtype=m_ref.dtype)
        l_ref[...] = jnp.zeros(l_ref.shape, dtype=l_ref.dtype)
        acc_ref[...] = jnp.zeros(acc_ref.shape, dtype=acc_ref.dtype)

    def _step(mask_tail):
        x_tile = x_ref[...]                                          # (tile_n, L)

        # Fused V/U projection: one MXU pass over x, lane-aligned split at d_hidden.
        h = jnp.dot(x_tile, wvu_ref[...],
                    preferred_element_type=jnp.float32)
        h = h + bvu_ref[...].astype(jnp.float32)                     # (tile_n, 2*Dp)
        a_v = jnp.tanh(h[:, :d_hidden])
        a_u = jax.nn.sigmoid(h[:, d_hidden:])
        gated = a_v * a_u                                            # (tile_n, Dp) f32

        # Attention logits directly in the lane-dense (K, tile_n) layout.
        a_t = lax.dot_general(wwT_ref[...].astype(jnp.float32), gated,
                              dimension_numbers=(((1,), (1,)), ((), ())),
                              preferred_element_type=jnp.float32)    # (K, tile_n)
        a_t = a_t + bw_ref[...].astype(jnp.float32)

        x_acc = x_tile.astype(jnp.float32)                           # f32 for pooling
        if mask_tail:
            # Only the single partially-valid tile pays for this (pl.when below).
            col = start + lax.broadcasted_iota(jnp.int32, a_t.shape, 1)
            a_t = jnp.where(col < nv, a_t, -jnp.inf)
            row = start + lax.broadcasted_iota(jnp.int32, x_acc.shape, 0)
            x_acc = jnp.where(row < nv, x_acc, 0.0)

        # Online softmax over the instance axis (lane axis within the tile).
        m_prev = m_ref[0]                                            # (K, 1)
        m_new = jnp.maximum(m_prev, jnp.max(a_t, axis=1, keepdims=True))
        alpha = jnp.exp(m_prev - m_new)
        p = jnp.exp(a_t - m_new)                                     # f32, (K, tile_n)
        l_ref[0] = alpha * l_ref[0] + jnp.sum(p, axis=1, keepdims=True)
        acc_ref[0] = alpha * acc_ref[0] + jnp.dot(
            p, x_acc, preferred_element_type=jnp.float32)
        m_ref[0] = m_new

    # Fast path: tile fully inside the valid range -> no mask work.
    @pl.when(start + tile_n <= nv)
    def _full():
        _step(mask_tail=False)

    # Ragged tail: exactly one tile can be partially valid.
    @pl.when(jnp.logical_and(start < nv, start + tile_n > nv))
    def _tail():
        _step(mask_tail=True)

    # Tiles with start >= nv (bucketed padding / clamped duplicates) are skipped.


def _tpu_kind():
    try:
        return jax.devices()[0].device_kind.lower()
    except Exception:
        return ""


def attention_with_classifier(x, params, *, tile_n=1024, core_split=None,
                              valid_len=None, vmem_limit_bytes=None):
    """x: (N, L). params: dict of fused / pre-transposed weights (see init_params).

    Returns pred of shape (K, num_cls) in float32, matching the torch forward
    (AA: (K, N) softmax over instances, afeat = AA @ x, pred = fc(afeat)).
    """
    N, L = x.shape
    assert N >= 1, "bag must contain at least one instance"
    wvu, bvu = params["w_vu"], params["b_vu"]
    wwT, bw = params["wwT"], params["bw"]
    wc, bc = params["wc"], params["bc"]
    Dp = wvu.shape[1] // 2
    K = wwT.shape[0]
    C = wc.shape[1]

    n_valid = int(N if valid_len is None else min(int(valid_len), N))
    assert n_valid >= 1, "valid_len must be >= 1"

    kind = _tpu_kind()
    big_vmem = ("v5" in kind) or ("v6" in kind)        # 128 MiB physical VMEM
    if core_split is None:
        core_split = 2 if "v7" in kind else 1          # v7x: 2 TensorCores / chip

    # ---- tile sizing + explicit VMEM budget (per review) --------------------
    tile_n = max(8, min(int(tile_n), _round_up(N, 8)))
    tile_n = _round_up(tile_n, 8)
    budget = (72 << 20) if big_vmem else (30 << 20)    # conservative on v7x/unknown

    x_item = x.dtype.itemsize
    w_item = wvu.dtype.itemsize

    def vmem_est(tn):
        x_buf = 2 * tn * L * x_item                               # double-buffered x
        wbuf = 2 * (L * 2 * Dp + 2 * Dp + K * Dp + K) * w_item    # resident weights
        obuf = 2 * 3 * K * (L + 2) * 4                            # m/l/acc out blocks
        act = tn * (3 * Dp + L) * 4 + 4 * K * tn * 4              # h, gated, x f32, logits
        return x_buf + wbuf + obuf + act

    while tile_n > 64 and vmem_est(tile_n) > budget:
        tile_n = max(64, _round_up(tile_n // 2, 8))

    if vmem_limit_bytes is None:
        cap = (100 << 20) if big_vmem else (52 << 20)
        vmem_limit_bytes = int(min(max(vmem_est(tile_n) + (8 << 20), 32 << 20), cap))

    # ---- grid: (split, instance-tile) ---------------------------------------
    n_blocks = pl.cdiv(N, tile_n)
    splits = max(1, min(int(core_split), n_blocks))
    inner = pl.cdiv(n_blocks, splits)
    last_block = n_blocks - 1

    kernel = functools.partial(_attn_pool_kernel, d_hidden=Dp, tile_n=tile_n,
                               blocks_per_split=inner)

    def x_map(c, j, nv):                      # nv = scalar-prefetch ref (unused here)
        return (jnp.minimum(c * inner + j, last_block), 0)

    const2 = lambda c, j, nv: (0, 0)
    out_map = lambda c, j, nv: (c, 0, 0)

    grid_spec = pltpu.PrefetchScalarGridSpec(
        num_scalar_prefetch=1,
        grid=(splits, inner),
        in_specs=[
            pl.BlockSpec((tile_n, L), x_map),        # x: streamed (no host pad)
            pl.BlockSpec((L, 2 * Dp), const2),       # fused V/U weight (resident)
            pl.BlockSpec((1, 2 * Dp), const2),       # fused V/U bias
            pl.BlockSpec((K, Dp), const2),           # attention weight (K, Dp)
            pl.BlockSpec((K, 1), const2),            # attention bias
        ],
        out_specs=[
            pl.BlockSpec((1, K, 1), out_map),        # running max partial
            pl.BlockSpec((1, K, 1), out_map),        # running sum partial
            pl.BlockSpec((1, K, L), out_map),        # weighted-feature partial
        ],
    )

    out_shapes = (
        jax.ShapeDtypeStruct((splits, K, 1), jnp.float32),
        jax.ShapeDtypeStruct((splits, K, 1), jnp.float32),
        jax.ShapeDtypeStruct((splits, K, L), jnp.float32),
    )

    cost = pl.CostEstimate(
        flops=int(N * (4 * L * Dp + 2 * Dp * K + 2 * K * L)),
        transcendentals=int(N * (2 * Dp + K)),
        bytes_accessed=int(N * L * x_item
                           + (L * 2 * Dp + 2 * Dp + K * Dp + K) * w_item
                           + splits * K * (L + 2) * 4),
    )

    m_p, l_p, acc_p = pl.pallas_call(
        kernel,
        out_shape=out_shapes,
        grid_spec=grid_spec,
        compiler_params=pltpu.CompilerParams(
            dimension_semantics=("parallel", "arbitrary"),
            vmem_limit_bytes=vmem_limit_bytes,
        ),
        cost_estimate=cost,
    )(jnp.full((1,), n_valid, dtype=jnp.int32), x, wvu, bvu, wwT, bw)

    # ---- tiny epilogue (plain JAX): merge per-split softmax partials + classifier.
    m_max = jnp.max(m_p, axis=0)                       # (K, 1)
    coeff = jnp.exp(m_p - m_max)                       # (splits, K, 1); -inf parts -> 0
    l_tot = jnp.sum(coeff * l_p, axis=0)               # (K, 1)
    afeat = jnp.sum(coeff * acc_p, axis=0) / l_tot     # (K, L)
    pred = afeat @ wc.astype(jnp.float32) + bc.astype(jnp.float32)
    return pred


def init_params(key, L, D, K, num_cls, dtype=jnp.float32):
    """PyTorch-style uniform init; V/U fused as (L, 2*Dp) with the hidden dim
    padded to a multiple of 128 lanes (zero pads => identical math), attention
    weight pre-transposed as (K, Dp)."""
    ks = jax.random.split(key, 8)

    def lin(kw, kb, fan_in, fan_out):
        bound = 1.0 / jnp.sqrt(fan_in)
        w = jax.random.uniform(kw, (fan_in, fan_out), jnp.float32, -bound, bound)
        b = jax.random.uniform(kb, (1, fan_out), jnp.float32, -bound, bound)
        return w, b

    wv, bv = lin(ks[0], ks[1], L, D)          # attention_V
    wu, bu = lin(ks[2], ks[3], L, D)          # attention_U
    ww, bw = lin(ks[4], ks[5], D, K)          # attention_weights
    wc, bc = lin(ks[6], ks[7], L, num_cls)    # classifier fc

    Dp = _round_up(D, 128)                    # lane-aligned V/U split boundary
    pad = Dp - D
    wv = jnp.pad(wv, ((0, 0), (0, pad)));  bv = jnp.pad(bv, ((0, 0), (0, pad)))
    wu = jnp.pad(wu, ((0, 0), (0, pad)));  bu = jnp.pad(bu, ((0, 0), (0, pad)))
    wwT = jnp.pad(ww.T, ((0, 0), (0, pad)))   # (K, Dp); pad cols are zero

    return {
        "w_vu": jnp.concatenate([wv, wu], axis=1).astype(dtype),   # (L, 2*Dp)
        "b_vu": jnp.concatenate([bv, bu], axis=1).astype(dtype),   # (1, 2*Dp)
        "wwT": wwT.astype(dtype),                                  # (K, Dp)
        "bw": bw.T.astype(jnp.float32),                            # (K, 1)
        "wc": wc.astype(jnp.float32),                              # (L, C)  (epilogue)
        "bc": bc.astype(jnp.float32),                              # (1, C)
    }


def reference(x, p):
    """Pure-JAX reference matching the PyTorch forward (f32 math)."""
    Dp = p["w_vu"].shape[1] // 2
    xf = x.astype(jnp.float32)
    h = xf @ p["w_vu"].astype(jnp.float32) + p["b_vu"].astype(jnp.float32)
    a_v = jnp.tanh(h[:, :Dp])
    a_u = jax.nn.sigmoid(h[:, Dp:])
    a = (a_v * a_u) @ p["wwT"].astype(jnp.float32).T + p["bw"].T   # (N, K)
    aa = jax.nn.softmax(a.T, axis=1)                               # (K, N)
    afeat = aa @ xf                                                # (K, L)
    return afeat @ p["wc"] + p["bc"]                               # (K, num_cls)


if __name__ == "__main__":
    # Small shapes consistent with the module (scaled-down L/D; one bag of N instances).
    L, D, K, NUM_CLS = 32, 16, 1, 2

    key = jax.random.PRNGKey(0)
    kx1, kx2, kx3, kp = jax.random.split(key, 4)
    params = init_params(kp, L, D, K, NUM_CLS)

    # Case 1: ragged bag (N % tile_n != 0), no host-side padding, multi-step
    # online softmax with the masked-tail path (tile_n=16 -> 4 tiles).
    N1 = 50
    x1 = jax.random.normal(kx1, (N1, L), jnp.float32)
    pred1 = jax.block_until_ready(
        attention_with_classifier(x1, params, tile_n=16, core_split=1))
    ref1 = reference(x1, params)
    assert pred1.shape == (K, NUM_CLS)
    assert jnp.allclose(pred1, ref1, atol=1e-5, rtol=1e-5), (pred1, ref1)

    # Case 2: same bag, two-way split of the reduction (v7x megacore path;
    # correct on any chip) + partial-merge epilogue.
    pred2 = jax.block_until_ready(
        attention_with_classifier(x1, params, tile_n=16, core_split=2))
    assert jnp.allclose(pred2, ref1, atol=1e-5, rtol=1e-5), (pred2, ref1)

    # Case 3: aligned bag, single tile, auto core-split / auto VMEM sizing.
    N2 = 64
    x2 = jax.random.normal(kx2, (N2, L), jnp.float32)
    pred3 = jax.block_until_ready(attention_with_classifier(x2, params, tile_n=64))
    ref3 = reference(x2, params)
    assert jnp.allclose(pred3, ref3, atol=1e-5, rtol=1e-5), (pred3, ref3)

    # Case 4: bf16-streamed x + bf16 weights (halved HBM stream), f32 accumulation,
    # ragged tail + two-way split.
    params_bf16 = init_params(kp, L, D, K, NUM_CLS, dtype=jnp.bfloat16)
    N3 = 200
    x3 = jax.random.normal(kx3, (N3, L), jnp.float32).astype(jnp.bfloat16)
    pred4 = jax.block_until_ready(
        attention_with_classifier(x3, params_bf16, tile_n=64, core_split=2))
    ref4 = reference(x3, params_bf16)   # f32 math on the same bf16-rounded inputs
    assert jnp.allclose(pred4, ref4, atol=5e-2, rtol=5e-2), (pred4, ref4)

    print("KERNEL_OK")
</pallas_src>

<mosaic_0001>
module attributes {stable_mosaic.version = 11 : i64} {
  func.func @_attn_pool_kernel(%arg0: i32, %arg1: i32, %arg2: memref<1xi32, #tpu.memory_space<smem>>, %arg3: memref<16x32xf32, #tpu.memory_space<vmem>>, %arg4: memref<32x256xf32, #tpu.memory_space<vmem>>, %arg5: memref<1x256xf32, #tpu.memory_space<vmem>>, %arg6: memref<1x128xf32, #tpu.memory_space<vmem>>, %arg7: memref<1x1xf32, #tpu.memory_space<vmem>>, %arg8: memref<1x1x1xf32, #tpu.memory_space<vmem>>, %arg9: memref<1x1x1xf32, #tpu.memory_space<vmem>>, %arg10: memref<1x1x32xf32, #tpu.memory_space<vmem>>) attributes {dimension_semantics = [#tpu.dimension_semantics<parallel>, #tpu.dimension_semantics<arbitrary>], iteration_bounds = array<i64: 1, 4>, scalar_prefetch = 1 : i64, scratch_operands = 0 : i64, tpu.core_type = #tpu.core_type<tc>, window_params = [{transform_indices = @transform_0, window_bounds = array<i64: 16, 32>}, {pipeline_mode = #tpu.pipeline_mode<synchronous>, transform_indices = @transform_1, window_bounds = array<i64: 32, 256>}, {pipeline_mode = #tpu.pipeline_mode<synchronous>, transform_indices = @transform_2, window_bounds = array<i64: 1, 256>}, {pipeline_mode = #tpu.pipeline_mode<synchronous>, transform_indices = @transform_3, window_bounds = array<i64: 1, 128>}, {pipeline_mode = #tpu.pipeline_mode<synchronous>, transform_indices = @transform_4, window_bounds = array<i64: 1, 1>}, {transform_indices = @transform_5, window_bounds = array<i64: 1, 1, 1>}, {transform_indices = @transform_6, window_bounds = array<i64: 1, 1, 1>}, {transform_indices = @transform_7, window_bounds = array<i64: 1, 1, 32>}]} {
    %c0 = arith.constant 0 : index
    %0 = memref.load %arg2[%c0] : memref<1xi32, #tpu.memory_space<smem>>
    %c4_i32 = arith.constant 4 : i32
    %1 = arith.muli %arg0, %c4_i32 : i32
    %2 = arith.addi %1, %arg1 : i32
    %c16_i32 = arith.constant 16 : i32
    %3 = arith.muli %2, %c16_i32 : i32
    %c0_i32 = arith.constant 0 : i32
    %4 = arith.cmpi eq, %arg1, %c0_i32 : i32
    %5 = arith.extui %4 : i1 to i32
    %c0_i32_0 = arith.constant 0 : i32
    %6 = arith.cmpi ne, %5, %c0_i32_0 : i32
    scf.if %6 {
      %cst = arith.constant 0xFF800000 : f32
      %17 = vector.broadcast %cst : f32 to vector<1x1x1xf32>
      %c0_5 = arith.constant 0 : index
      %c0_6 = arith.constant 0 : index
      %c0_7 = arith.constant 0 : index
      %18 = vector.load %arg8[%c0_5, %c0_6, %c0_7] : memref<1x1x1xf32, #tpu.memory_space<vmem>>, vector<1x1x1xf32>
      tpu.vector_store %arg8[%c0_5, %c0_6, %c0_7], %17 {strides = array<i32>} : memref<1x1x1xf32, #tpu.memory_space<vmem>>, vector<1x1x1xf32>,
      %cst_8 = arith.constant 0.000000e+00 : f32
      %19 = vector.broadcast %cst_8 : f32 to vector<1x1x1xf32>
      %c0_9 = arith.constant 0 : index
      %c0_10 = arith.constant 0 : index
      %c0_11 = arith.constant 0 : index
      %20 = vector.load %arg9[%c0_9, %c0_10, %c0_11] : memref<1x1x1xf32, #tpu.memory_space<vmem>>, vector<1x1x1xf32>
      tpu.vector_store %arg9[%c0_9, %c0_10, %c0_11], %19 {strides = array<i32>} : memref<1x1x1xf32, #tpu.memory_space<vmem>>, vector<1x1x1xf32>,
      %cst_12 = arith.constant 0.000000e+00 : f32
      %21 = vector.broadcast %cst_12 : f32 to vector<1x1x32xf32>
      %c0_13 = arith.constant 0 : index
      %c0_14 = arith.constant 0 : index
      %c0_15 = arith.constant 0 : index
      %22 = vector.load %arg10[%c0_13, %c0_14, %c0_15] : memref<1x1x32xf32, #tpu.memory_space<vmem>>, vector<1x1x32xf32>
      tpu.vector_store %arg10[%c0_13, %c0_14, %c0_15], %21 {strides = array<i32>} : memref<1x1x32xf32, #tpu.memory_space<vmem>>, vector<1x1x32xf32>,
    } else {
    }
    %c16_i32_1 = arith.constant 16 : i32
    %7 = arith.addi %3, %c16_i32_1 : i32
    %8 = arith.cmpi sle, %7, %0 : i32
    %9 = arith.extui %8 : i1 to i32
    %c0_i32_2 = arith.constant 0 : i32
    %10 = arith.cmpi ne, %9, %c0_i32_2 : i32
    scf.if %10 {
      %c0_5 = arith.constant 0 : index
      %c0_6 = arith.constant 0 : index
      %17 = vector.load %arg3[%c0_5, %c0_6] : memref<16x32xf32, #tpu.memory_space<vmem>>, vector<16x32xf32>
      %c0_7 = arith.constant 0 : index
      %c0_8 = arith.constant 0 : index
      %18 = vector.load %arg4[%c0_7, %c0_8] : memref<32x256xf32, #tpu.memory_space<vmem>>, vector<32x256xf32>
      %cst = arith.constant dense<0.000000e+00> : vector<16x256xf32>
      %19 = tpu.matmul %17, %18, %cst {dimension_numbers = #tpu.dot_dimension_numbers<[1], [0], [0], [1], [0, 0, 1, 1], [], []>} : vector<16x32xf32>, vector<32x256xf32>, vector<16x256xf32> -> vector<16x256xf32>
      %c0_9 = arith.constant 0 : index
      %c0_10 = arith.constant 0 : index
      %20 = vector.load %arg5[%c0_9, %c0_10] : memref<1x256xf32, #tpu.memory_space<vmem>>, vector<1x256xf32>
      %21 = vector.broadcast %20 : vector<1x256xf32> to vector<16x256xf32>
      %22 = arith.addf %19, %21 : vector<16x256xf32>
      %23 = vector.extract_strided_slice %22 {offsets = [0, 0], sizes = [16, 128], strides = [1, 1]} : vector<16x256xf32> to vector<16x128xf32>
      %24 = math.tanh %23 : vector<16x128xf32>
      %25 = vector.extract_strided_slice %22 {offsets = [0, 128], sizes = [16, 128], strides = [1, 1]} : vector<16x256xf32> to vector<16x128xf32>
      %26 = arith.negf %25 : vector<16x128xf32>
      %27 = math.exp %26 : vector<16x128xf32>
      %cst_11 = arith.constant 1.000000e+00 : f32
      %28 = vector.broadcast %cst_11 : f32 to vector<16x128xf32>
      %29 = arith.addf %28, %27 : vector<16x128xf32>
      %30 = arith.divf %28, %29 : vector<16x128xf32>
      %31 = arith.mulf %24, %30 : vector<16x128xf32>
      %c0_12 = arith.constant 0 : index
      %c0_13 = arith.constant 0 : index
      %32 = vector.load %arg6[%c0_12, %c0_13] : memref<1x128xf32, #tpu.memory_space<vmem>>, vector<1x128xf32>
      %cst_14 = arith.constant dense<0.000000e+00> : vector<1x16xf32>
      %33 = tpu.matmul %32, %31, %cst_14 {dimension_numbers = #tpu.dot_dimension_numbers<[1], [1], [0], [0], [0, 0, 1, 0], [], []>} : vector<1x128xf32>, vector<16x128xf32>, vector<1x16xf32> -> vector<1x16xf32>
      %c0_15 = arith.constant 0 : index
      %c0_16 = arith.constant 0 : index
      %34 = vector.load %arg7[%c0_15, %c0_16] : memref<1x1xf32, #tpu.memory_space<vmem>>, vector<1x1xf32>
      %35 = vector.broadcast %34 : vector<1x1xf32> to vector<1x16xf32>
      %36 = arith.addf %33, %35 : vector<1x16xf32>
      %c0_17 = arith.constant 0 : index
      %c0_18 = arith.constant 0 : index
      %c0_19 = arith.constant 0 : index
      %37 = vector.load %arg8[%c0_17, %c0_18, %c0_19] : memref<1x1x1xf32, #tpu.memory_space<vmem>>, vector<1x1x1xf32>
      %38 = vector.shape_cast %37 : vector<1x1x1xf32> to vector<1x1xf32>
      %cst_20 = arith.constant dense<0xFF800000> : vector<1xf32>
      %39 = vector.multi_reduction <maximumf>, %36, %cst_20 [1] : vector<1x16xf32> to vector<1xf32>
      %40 = vector.shape_cast %39 : vector<1xf32> to vector<1x1xf32>
      %41 = arith.maximumf %38, %40 : vector<1x1xf32>
      %42 = arith.subf %38, %41 : vector<1x1xf32>
      %43 = math.exp %42 : vector<1x1xf32>
      %44 = vector.broadcast %41 : vector<1x1xf32> to vector<1x16xf32>
      %45 = arith.subf %36, %44 : vector<1x16xf32>
      %46 = math.exp %45 : vector<1x16xf32>
      %c0_21 = arith.constant 0 : index
      %c0_22 = arith.constant 0 : index
      %c0_23 = arith.constant 0 : index
      %47 = vector.load %arg9[%c0_21, %c0_22, %c0_23] : memref<1x1x1xf32, #tpu.memory_space<vmem>>, vector<1x1x1xf32>
      %48 = vector.shape_cast %47 : vector<1x1x1xf32> to vector<1x1xf32>
      %49 = arith.mulf %43, %48 : vector<1x1xf32>
      %cst_24 = arith.constant dense<0.000000e+00> : vector<1xf32>
      %50 = vector.multi_reduction <add>, %46, %cst_24 [1] : vector<1x16xf32> to vector<1xf32>
      %51 = vector.shape_cast %50 : vector<1xf32> to vector<1x1xf32>
      %52 = arith.addf %49, %51 : vector<1x1xf32>
      %c0_25 = arith.constant 0 : index
      %c0_26 = arith.constant 0 : index
      %c0_27 = arith.constant 0 : index
      %53 = vector.load %arg9[%c0_25, %c0_26, %c0_27] : memref<1x1x1xf32, #tpu.memory_space<vmem>>, vector<1x1x1xf32>
      %54 = vector.shape_cast %53 : vector<1x1x1xf32> to vector<1x1xf32>
      %55 = vector.shape_cast %52 : vector<1x1xf32> to vector<1x1x1xf32>
      tpu.vector_store %arg9[%c0_25, %c0_26, %c0_27], %55 {strides = array<i32>} : memref<1x1x1xf32, #tpu.memory_space<vmem>>, vector<1x1x1xf32>,
      %c0_28 = arith.constant 0 : index
      %c0_29 = arith.constant 0 : index
      %c0_30 = arith.constant 0 : index
      %56 = vector.load %arg10[%c0_28, %c0_29, %c0_30] : memref<1x1x32xf32, #tpu.memory_space<vmem>>, vector<1x1x32xf32>
      %57 = vector.shape_cast %56 : vector<1x1x32xf32> to vector<1x32xf32>
      %58 = vector.broadcast %43 : vector<1x1xf32> to vector<1x32xf32>
      %59 = arith.mulf %58, %57 : vector<1x32xf32>
      %cst_31 = arith.constant dense<0.000000e+00> : vector<1x32xf32>
      %60 = tpu.matmul %46, %17, %cst_31 {dimension_numbers = #tpu.dot_dimension_numbers<[1], [0], [0], [1], [0, 0, 1, 1], [], []>} : vector<1x16xf32>, vector<16x32xf32>, vector<1x32xf32> -> vector<1x32xf32>
      %61 = arith.addf %59, %60 : vector<1x32xf32>
      %c0_32 = arith.constant 0 : index
      %c0_33 = arith.constant 0 : index
      %c0_34 = arith.constant 0 : index
      %62 = vector.load %arg10[%c0_32, %c0_33, %c0_34] : memref<1x1x32xf32, #tpu.memory_space<vmem>>, vector<1x1x32xf32>
      %63 = vector.shape_cast %62 : vector<1x1x32xf32> to vector<1x32xf32>
      %64 = vector.shape_cast %61 : vector<1x32xf32> to vector<1x1x32xf32>
      tpu.vector_store %arg10[%c0_32, %c0_33, %c0_34], %64 {strides = array<i32>} : memref<1x1x32xf32, #tpu.memory_space<vmem>>, vector<1x1x32xf32>,
      %c0_35 = arith.constant 0 : index
      %c0_36 = arith.constant 0 : index
      %c0_37 = arith.constant 0 : index
      %65 = vector.load %arg8[%c0_35, %c0_36, %c0_37] : memref<1x1x1xf32, #tpu.memory_space<vmem>>, vector<1x1x1xf32>
      %66 = vector.shape_cast %65 : vector<1x1x1xf32> to vector<1x1xf32>
      %67 = vector.shape_cast %41 : vector<1x1xf32> to vector<1x1x1xf32>
      tpu.vector_store %arg8[%c0_35, %c0_36, %c0_37], %67 {strides = array<i32>} : memref<1x1x1xf32, #tpu.memory_space<vmem>>, vector<1x1x1xf32>,
    } else {
    }
    %11 = arith.cmpi slt, %3, %0 : i32
    %c16_i32_3 = arith.constant 16 : i32
    %12 = arith.addi %3, %c16_i32_3 : i32
    %13 = arith.cmpi sgt, %12, %0 : i32
    %14 = arith.andi %11, %13 : i1
    %15 = arith.extui %14 : i1 to i32
    %c0_i32_4 = arith.constant 0 : i32
    %16 = arith.cmpi ne, %15, %c0_i32_4 : i32
    scf.if %16 {
      %c0_5 = arith.constant 0 : index
      %c0_6 = arith.constant 0 : index
      %17 = vector.load %arg3[%c0_5, %c0_6] : memref<16x32xf32, #tpu.memory_space<vmem>>, vector<16x32xf32>
      %c0_7 = arith.constant 0 : index
      %c0_8 = arith.constant 0 : index
      %18 = vector.load %arg4[%c0_7, %c0_8] : memref<32x256xf32, #tpu.memory_space<vmem>>, vector<32x256xf32>
      %cst = arith.constant dense<0.000000e+00> : vector<16x256xf32>
      %19 = tpu.matmul %17, %18, %cst {dimension_numbers = #tpu.dot_dimension_numbers<[1], [0], [0], [1], [0, 0, 1, 1], [], []>} : vector<16x32xf32>, vector<32x256xf32>, vector<16x256xf32> -> vector<16x256xf32>
      %c0_9 = arith.constant 0 : index
      %c0_10 = arith.constant 0 : index
      %20 = vector.load %arg5[%c0_9, %c0_10] : memref<1x256xf32, #tpu.memory_space<vmem>>, vector<1x256xf32>
      %21 = vector.broadcast %20 : vector<1x256xf32> to vector<16x256xf32>
      %22 = arith.addf %19, %21 : vector<16x256xf32>
      %23 = vector.extract_strided_slice %22 {offsets = [0, 0], sizes = [16, 128], strides = [1, 1]} : vector<16x256xf32> to vector<16x128xf32>
      %24 = math.tanh %23 : vector<16x128xf32>
      %25 = vector.extract_strided_slice %22 {offsets = [0, 128], sizes = [16, 128], strides = [1, 1]} : vector<16x256xf32> to vector<16x128xf32>
      %26 = arith.negf %25 : vector<16x128xf32>
      %27 = math.exp %26 : vector<16x128xf32>
      %cst_11 = arith.constant 1.000000e+00 : f32
      %28 = vector.broadcast %cst_11 : f32 to vector<16x128xf32>
      %29 = arith.addf %28, %27 : vector<16x128xf32>
      %30 = arith.divf %28, %29 : vector<16x128xf32>
      %31 = arith.mulf %24, %30 : vector<16x128xf32>
      %c0_12 = arith.constant 0 : index
      %c0_13 = arith.constant 0 : index
      %32 = vector.load %arg6[%c0_12, %c0_13] : memref<1x128xf32, #tpu.memory_space<vmem>>, vector<1x128xf32>
      %cst_14 = arith.constant dense<0.000000e+00> : vector<1x16xf32>
      %33 = tpu.matmul %32, %31, %cst_14 {dimension_numbers = #tpu.dot_dimension_numbers<[1], [1], [0], [0], [0, 0, 1, 0], [], []>} : vector<1x128xf32>, vector<16x128xf32>, vector<1x16xf32> -> vector<1x16xf32>
      %c0_15 = arith.constant 0 : index
      %c0_16 = arith.constant 0 : index
      %34 = vector.load %arg7[%c0_15, %c0_16] : memref<1x1xf32, #tpu.memory_space<vmem>>, vector<1x1xf32>
      %35 = vector.broadcast %34 : vector<1x1xf32> to vector<1x16xf32>
      %36 = arith.addf %33, %35 : vector<1x16xf32>
      %37 = tpu.iota {dimensions = array<i32: 1>} : vector<1x16xi32>
      %38 = vector.broadcast %3 : i32 to vector<1x16xi32>
      %39 = arith.addi %38, %37 : vector<1x16xi32>
      %40 = vector.broadcast %0 : i32 to vector<1x16xi32>
      %41 = arith.cmpi slt, %39, %40 : vector<1x16xi32>
      %cst_17 = arith.constant 0xFF800000 : f32
      %42 = vector.broadcast %cst_17 : f32 to vector<1x16xf32>
      %43 = arith.select %41, %36, %42 : vector<1x16xi1>, vector<1x16xf32>
      %44 = tpu.iota {dimensions = array<i32: 0>} : vector<16x32xi32>
      %45 = vector.broadcast %3 : i32 to vector<16x32xi32>
      %46 = arith.addi %45, %44 : vector<16x32xi32>
      %47 = vector.broadcast %0 : i32 to vector<16x32xi32>
      %48 = arith.cmpi slt, %46, %47 : vector<16x32xi32>
      %cst_18 = arith.constant 0.000000e+00 : f32
      %49 = vector.broadcast %cst_18 : f32 to vector<16x32xf32>
      %50 = arith.select %48, %17, %49 : vector<16x32xi1>, vector<16x32xf32>
      %c0_19 = arith.constant 0 : index
      %c0_20 = arith.constant 0 : index
      %c0_21 = arith.constant 0 : index
      %51 = vector.load %arg8[%c0_19, %c0_20, %c0_21] : memref<1x1x1xf32, #tpu.memory_space<vmem>>, vector<1x1x1xf32>
      %52 = vector.shape_cast %51 : vector<1x1x1xf32> to vector<1x1xf32>
      %cst_22 = arith.constant dense<0xFF800000> : vector<1xf32>
      %53 = vector.multi_reduction <maximumf>, %43, %cst_22 [1] : vector<1x16xf32> to vector<1xf32>
      %54 = vector.shape_cast %53 : vector<1xf32> to vector<1x1xf32>
      %55 = arith.maximumf %52, %54 : vector<1x1xf32>
      %56 = arith.subf %52, %55 : vector<1x1xf32>
      %57 = math.exp %56 : vector<1x1xf32>
      %58 = vector.broadcast %55 : vector<1x1xf32> to vector<1x16xf32>
      %59 = arith.subf %43, %58 : vector<1x16xf32>
      %60 = math.exp %59 : vector<1x16xf32>
      %c0_23 = arith.constant 0 : index
      %c0_24 = arith.constant 0 : index
      %c0_25 = arith.constant 0 : index
      %61 = vector.load %arg9[%c0_23, %c0_24, %c0_25] : memref<1x1x1xf32, #tpu.memory_space<vmem>>, vector<1x1x1xf32>
      %62 = vector.shape_cast %61 : vector<1x1x1xf32> to vector<1x1xf32>
      %63 = arith.mulf %57, %62 : vector<1x1xf32>
      %cst_26 = arith.constant dense<0.000000e+00> : vector<1xf32>
      %64 = vector.multi_reduction <add>, %60, %cst_26 [1] : vector<1x16xf32> to vector<1xf32>
      %65 = vector.shape_cast %64 : vector<1xf32> to vector<1x1xf32>
      %66 = arith.addf %63, %65 : vector<1x1xf32>
      %c0_27 = arith.constant 0 : index
      %c0_28 = arith.constant 0 : index
      %c0_29 = arith.constant 0 : index
      %67 = vector.load %arg9[%c0_27, %c0_28, %c0_29] : memref<1x1x1xf32, #tpu.memory_space<vmem>>, vector<1x1x1xf32>
      %68 = vector.shape_cast %67 : vector<1x1x1xf32> to vector<1x1xf32>
      %69 = vector.shape_cast %66 : vector<1x1xf32> to vector<1x1x1xf32>
      tpu.vector_store %arg9[%c0_27, %c0_28, %c0_29], %69 {strides = array<i32>} : memref<1x1x1xf32, #tpu.memory_space<vmem>>, vector<1x1x1xf32>,
      %c0_30 = arith.constant 0 : index
      %c0_31 = arith.constant 0 : index
      %c0_32 = arith.constant 0 : index
      %70 = vector.load %arg10[%c0_30, %c0_31, %c0_32] : memref<1x1x32xf32, #tpu.memory_space<vmem>>, vector<1x1x32xf32>
      %71 = vector.shape_cast %70 : vector<1x1x32xf32> to vector<1x32xf32>
      %72 = vector.broadcast %57 : vector<1x1xf32> to vector<1x32xf32>
      %73 = arith.mulf %72, %71 : vector<1x32xf32>
      %cst_33 = arith.constant dense<0.000000e+00> : vector<1x32xf32>
      %74 = tpu.matmul %60, %50, %cst_33 {dimension_numbers = #tpu.dot_dimension_numbers<[1], [0], [0], [1], [0, 0, 1, 1], [], []>} : vector<1x16xf32>, vector<16x32xf32>, vector<1x32xf32> -> vector<1x32xf32>
      %75 = arith.addf %73, %74 : vector<1x32xf32>
      %c0_34 = arith.constant 0 : index
      %c0_35 = arith.constant 0 : index
      %c0_36 = arith.constant 0 : index
      %76 = vector.load %arg10[%c0_34, %c0_35, %c0_36] : memref<1x1x32xf32, #tpu.memory_space<vmem>>, vector<1x1x32xf32>
      %77 = vector.shape_cast %76 : vector<1x1x32xf32> to vector<1x32xf32>
      %78 = vector.shape_cast %75 : vector<1x32xf32> to vector<1x1x32xf32>
      tpu.vector_store %arg10[%c0_34, %c0_35, %c0_36], %78 {strides = array<i32>} : memref<1x1x32xf32, #tpu.memory_space<vmem>>, vector<1x1x32xf32>,
      %c0_37 = arith.constant 0 : index
      %c0_38 = arith.constant 0 : index
      %c0_39 = arith.constant 0 : index
      %79 = vector.load %arg8[%c0_37, %c0_38, %c0_39] : memref<1x1x1xf32, #tpu.memory_space<vmem>>, vector<1x1x1xf32>
      %80 = vector.shape_cast %79 : vector<1x1x1xf32> to vector<1x1xf32>
      %81 = vector.shape_cast %55 : vector<1x1xf32> to vector<1x1x1xf32>
      tpu.vector_store %arg8[%c0_37, %c0_38, %c0_39], %81 {strides = array<i32>} : memref<1x1x1xf32, #tpu.memory_space<vmem>>, vector<1x1x1xf32>,
    } else {
    }
    return
  }
  func.func @transform_0(%arg0: i32, %arg1: i32, %arg2: memref<1xi32, #tpu.memory_space<smem>>) -> (i32, i32) {
    %c4_i32 = arith.constant 4 : i32
    %0 = arith.muli %arg0, %c4_i32 : i32
    %1 = arith.addi %0, %arg1 : i32
    %c3_i32 = arith.constant 3 : i32
    %2 = arith.minsi %1, %c3_i32 : i32
    %c0_i32 = arith.constant 0 : i32
    %c0_i32_0 = arith.constant 0 : i32
    return %2, %c0_i32 : i32, i32
  }
  func.func @transform_1(%arg0: i32, %arg1: i32, %arg2: memref<1xi32, #tpu.memory_space<smem>>) -> (i32, i32) {
    %c0_i32 = arith.constant 0 : i32
    %c0_i32_0 = arith.constant 0 : i32
    %c0_i32_1 = arith.constant 0 : i32
    return %c0_i32, %c0_i32_0 : i32, i32
  }
  func.func @transform_2(%arg0: i32, %arg1: i32, %arg2: memref<1xi32, #tpu.memory_space<smem>>) -> (i32, i32) {
    %c0_i32 = arith.constant 0 : i32
    %c0_i32_0 = arith.constant 0 : i32
    %c0_i32_1 = arith.constant 0 : i32
    return %c0_i32, %c0_i32_0 : i32, i32
  }
  func.func @transform_3(%arg0: i32, %arg1: i32, %arg2: memref<1xi32, #tpu.memory_space<smem>>) -> (i32, i32) {
    %c0_i32 = arith.constant 0 : i32
    %c0_i32_0 = arith.constant 0 : i32
    %c0_i32_1 = arith.constant 0 : i32
    return %c0_i32, %c0_i32_0 : i32, i32
  }
  func.func @transform_4(%arg0: i32, %arg1: i32, %arg2: memref<1xi32, #tpu.memory_space<smem>>) -> (i32, i32) {
    %c0_i32 = arith.constant 0 : i32
    %c0_i32_0 = arith.constant 0 : i32
    %c0_i32_1 = arith.constant 0 : i32
    return %c0_i32, %c0_i32_0 : i32, i32
  }
  func.func @transform_5(%arg0: i32, %arg1: i32, %arg2: memref<1xi32, #tpu.memory_space<smem>>) -> (i32, i32, i32) {
    %c0_i32 = arith.constant 0 : i32
    %c0_i32_0 = arith.constant 0 : i32
    %c0_i32_1 = arith.constant 0 : i32
    return %arg0, %c0_i32, %c0_i32_0 : i32, i32, i32
  }
  func.func @transform_6(%arg0: i32, %arg1: i32, %arg2: memref<1xi32, #tpu.memory_space<smem>>) -> (i32, i32, i32) {
    %c0_i32 = arith.constant 0 : i32
    %c0_i32_0 = arith.constant 0 : i32
    %c0_i32_1 = arith.constant 0 : i32
    return %arg0, %c0_i32, %c0_i32_0 : i32, i32, i32
  }
  func.func @transform_7(%arg0: i32, %arg1: i32, %arg2: memref<1xi32, #tpu.memory_space<smem>>) -> (i32, i32, i32) {
    %c0_i32 = arith.constant 0 : i32
    %c0_i32_0 = arith.constant 0 : i32
    %c0_i32_1 = arith.constant 0 : i32
    return %arg0, %c0_i32, %c0_i32_0 : i32, i32, i32
  }
}

</mosaic_0001>

<llo_original>
// kernel: tpu_custom_call.1
$region0: #{tpu_custom_call.1}
  #allocation0 [shape = 'u32[]', space=smem, size = 0x4, offset = 0x4, fixed_abs, tag = 'smem constant byte address 0x4 - core index']
  #allocation1 [shape = 'u32[144,128]{1,0:T(1,128)}', space=vmem, size = 0x12000, scoped, tag = 'internal scratch']
  #allocation2 [shape = 's32[1]{0}', space=sflag, size = 0x4, scoped, tag = 'scoped memory for tpu_custom_call.1']
  #allocation3 [shape = 's32[1]{0:T(128)S(6)}', space=smem, size = 0x200, scoped, tag = 'prefetched SMEM operand 0']
  #allocation4 [shape = 'f32[1,1]{1,0:T(1,128)S(1)}', space=vmem, size = 0x200, scoped, tag = 'scoped memory for tpu_custom_call.1']
  %s0 = inlined_call_operand.<no memory space> [shape: s32[1], index: 0, kind: input, shape index: {}]
  %s1 = inlined_call_operand.vmem [shape: f32[50,32], index: 1, kind: input, shape index: {}]
  %s2 = inlined_call_operand.vmem [shape: f32[32,256], index: 2, kind: input, shape index: {}]
  %s3 = inlined_call_operand.vmem [shape: f32[1,256], index: 3, kind: input, shape index: {}]
  %s4 = inlined_call_operand.vmem [shape: f32[1,128], index: 4, kind: input, shape index: {}]
  %s5 = inlined_call_operand.<no memory space> [shape: f32[1,1], index: 5, kind: input, shape index: {}]
  %s6 = inlined_call_operand.hbm [shape: f32[1,1,1], index: 6, kind: output, shape index: {0}]
  %s7 = inlined_call_operand.hbm [shape: f32[1,1,1], index: 7, kind: output, shape index: {1}]
  %s8 = inlined_call_operand.hbm [shape: f32[1,1,32], index: 8, kind: output, shape index: {2}]
  %9 = xla_tuple %s6, %s7, %s8
  %s10 = sld [smem:[#allocation0]]
  $region81: #{tpu_custom_call.1} parent=0
    _
  %s12 = ssub.s32 1, %s10
  %s13 = scalar_select 0, %s12, %s10
  %14 = sst [smem:[#allocation3]] %s0
  %v15 = vstv %s5
  %16 = vst [vmem:[#allocation4] sm:$0x1] %v15
  $region1: #{tpu_custom_call.1} parent=0
    #allocation5 [shape = 'u8[512]{0}', space=vmem, size = 0x400, scoped, tag = 'output window, operand 0, single buffered']
    #allocation6 [shape = 's32[2]{0}', space=sflag, size = 0x8, scoped, tag = 'scoped memory for tpu_custom_call.1']
    #allocation7 [shape = 'u8[512]{0}', space=vmem, size = 0x400, scoped, tag = 'output window, operand 1, single buffered']
    #allocation8 [shape = 's32[1]{0}', space=sflag, size = 0x4, scoped, tag = 'scoped memory for tpu_custom_call.1']
    #allocation9 [shape = 'u8[512]{0}', space=vmem, size = 0x400, scoped, tag = 'output window, operand 2, single buffered']
    %17 = vsyncpa [#allocation6], 0
    %18 = vsyncpa [#allocation8], 0
    loop: start=0, step=1, limit=6
    $region2: #{tpu_custom_call.1} parent=1 // loop_pre_header
      _
    $region3: #{tpu_custom_call.1} parent=1 // loop_header
      %s20 = sphi 0, %s24
      %p21 = scmp.ge.s32.totalorder %s20, 6
      %s27 = sphi 0, %s39
      %s28 = sphi 0, %s35
      %s29 = sphi 0, %s27
      %s30 = sphi 0, %s28
      %s31 = sphi 0, %s29
      %s32 = sphi 0, %s30
      %s50 = sphi 0, %s52
      %s53 = sphi 0, %s50
      %s54 = sphi 0, %s53
      %s70 = sphi 0, %s54
      %s74 = sphi 0, %s74
      %s76 = sphi 0, %s74
      %s77 = sphi 0, %s76
      %s91 = sphi 0, %s77
      %s95 = sphi 0, %s95
      %s97 = sphi 0, %s95
      %s98 = sphi 0, %s97
      %s112 = sphi 0, %s98
      %s116 = sphi 0, %s116
      %s118 = sphi 0, %s116
      %s119 = sphi 0, %s118
      %s133 = sphi 0, %s119
      %s137 = sphi 0, %s137
      %s139 = sphi 0, %s137
      %s140 = sphi 0, %s139
      %s154 = sphi 0, %s140
      %s160 = sphi 0, %s162
      %s163 = sphi 0, %s160
      %s164 = sphi 0, %s163
      %s180 = sphi 0, %s164
      %s186 = sphi 0, %s188
      %s189 = sphi 0, %s186
      %s190 = sphi 0, %s189
      %s206 = sphi 0, %s190
      %s212 = sphi 0, %s214
      %s215 = sphi 0, %s212
      %s216 = sphi 0, %s215
      %s232 = sphi 0, %s216
    $region4: #{tpu_custom_call.1} parent=1 // loop_header_branch
      %23 = sbr.rel (%p21) target = $region8
    $region5: #{tpu_custom_call.1} parent=1 // loop_body
      %s25 = ssub.s32 %s20, 1
      %s26 = ssub.s32 %s20, 2
      %s33 = sadd.s32 1, %s28
      %p34 = scmp.ge.s32.totalorder %s33, 4
      %s35 = scalar_select %p34, 0, %s33
      %s36 = sadd.s32 1, %s27
      %s37 = scalar_select %p34, %s36, %s27
      %p38 = scmp.ge.s32.totalorder %s37, 1
      %s39 = scalar_select %p38, 0, %s37
      %s40 = smul.u32 %s27, 4
      %s41 = sadd.s32 %s40, %s28
      %p42 = scmp.lt.s32.totalorder %s41, 3
      %s43 = scalar_select %p42, %s41, 3
      %s44 = smul.u32 %s39, 4
      %s45 = sadd.s32 %s44, %s35
      %p46 = scmp.lt.s32.totalorder %s45, 3
      %s47 = scalar_select %p46, %s45, 3
      %s48 = ssub.s32 %s43, %s47
      %p49 = scmp.eq.s32.totalorder %s48, 0
      %s51 = sadd.s32 %s50, 1
      %s52 = scalar_select %p49, %s50, %s51
      %p55 = pneg %p49
      %p56 = scmp.eq.s32.totalorder %s20, 3
      %p57 = por %p55, %p56
      %p58 = scmp.ne.s32.totalorder %s50, %s53
      %p59 = scmp.eq.s32.totalorder %s20, 0
      %p60 = por %p58, %p59
      %p61 = scmp.ne.s32.totalorder %s50, %s53
      %p62 = scmp.eq.s32.totalorder %s25, 3
      %p63 = por %p61, %p62
      %p64 = scmp.ne.s32.totalorder %s53, %s54
      %p65 = scmp.eq.s32.totalorder %s25, 0
      %p66 = por %p64, %p65
      %p67 = scmp.ne.s32.totalorder %s53, %s54
      %p68 = scmp.eq.s32.totalorder %s26, 3
      %p69 = por %p67, %p68
      %p71 = scmp.ne.s32.totalorder %s54, %s70
      %p72 = scmp.eq.s32.totalorder %s26, 0
      %p73 = por %p71, %p72
      %s75 = sadd.s32 %s74, 1
      %p78 = scmp.eq.s32.totalorder %s20, 3
      %p79 = scmp.ne.s32.totalorder %s74, %s76
      %p80 = scmp.eq.s32.totalorder %s20, 0
      %p81 = por %p79, %p80
      %p82 = scmp.ne.s32.totalorder %s74, %s76
      %p83 = scmp.eq.s32.totalorder %s25, 3
      %p84 = por %p82, %p83
      %p85 = scmp.ne.s32.totalorder %s76, %s77
      %p86 = scmp.eq.s32.totalorder %s25, 0
      %p87 = por %p85, %p86
      %p88 = scmp.ne.s32.totalorder %s76, %s77
      %p89 = scmp.eq.s32.totalorder %s26, 3
      %p90 = por %p88, %p89
      %p92 = scmp.ne.s32.totalorder %s77, %s91
      %p93 = scmp.eq.s32.totalorder %s26, 0
      %p94 = por %p92, %p93
      %s96 = sadd.s32 %s95, 1
      %p99 = scmp.eq.s32.totalorder %s20, 3
      %p100 = scmp.ne.s32.totalorder %s95, %s97
      %p101 = scmp.eq.s32.totalorder %s20, 0
      %p102 = por %p100, %p101
      %p103 = scmp.ne.s32.totalorder %s95, %s97
      %p104 = scmp.eq.s32.totalorder %s25, 3
      %p105 = por %p103, %p104
      %p106 = scmp.ne.s32.totalorder %s97, %s98
      %p107 = scmp.eq.s32.totalorder %s25, 0
      %p108 = por %p106, %p107
      %p109 = scmp.ne.s32.totalorder %s97, %s98
      %p110 = scmp.eq.s32.totalorder %s26, 3
      %p111 = por %p109, %p110
      %p113 = scmp.ne.s32.totalorder %s98, %s112
      %p114 = scmp.eq.s32.totalorder %s26, 0
      %p115 = por %p113, %p114
      %s117 = sadd.s32 %s116, 1
      %p120 = scmp.eq.s32.totalorder %s20, 3
      %p121 = scmp.ne.s32.totalorder %s116, %s118
      %p122 = scmp.eq.s32.totalorder %s20, 0
      %p123 = por %p121, %p122
      %p124 = scmp.ne.s32.totalorder %s116, %s118
      %p125 = scmp.eq.s32.totalorder %s25, 3
      %p126 = por %p124, %p125
      %p127 = scmp.ne.s32.totalorder %s118, %s119
      %p128 = scmp.eq.s32.totalorder %s25, 0
      %p129 = por %p127, %p128
      %p130 = scmp.ne.s32.totalorder %s118, %s119
      %p131 = scmp.eq.s32.totalorder %s26, 3
      %p132 = por %p130, %p131
      %p134 = scmp.ne.s32.totalorder %s119, %s133
      %p135 = scmp.eq.s32.totalorder %s26, 0
      %p136 = por %p134, %p135
      %s138 = sadd.s32 %s137, 1
      %p141 = scmp.eq.s32.totalorder %s20, 3
      %p142 = scmp.ne.s32.totalorder %s137, %s139
      %p143 = scmp.eq.s32.totalorder %s20, 0
      %p144 = por %p142, %p143
      %p145 = scmp.ne.s32.totalorder %s137, %s139
      %p146 = scmp.eq.s32.totalorder %s25, 3
      %p147 = por %p145, %p146
      %p148 = scmp.ne.s32.totalorder %s139, %s140
      %p149 = scmp.eq.s32.totalorder %s25, 0
      %p150 = por %p148, %p149
      %p151 = scmp.ne.s32.totalorder %s139, %s140
      %p152 = scmp.eq.s32.totalorder %s26, 3
      %p153 = por %p151, %p152
      %p155 = scmp.ne.s32.totalorder %s140, %s154
      %p156 = scmp.eq.s32.totalorder %s26, 0
      %p157 = por %p155, %p156
      %s158 = ssub.s32 %s27, %s39
      %p159 = scmp.eq.s32.totalorder %s158, 0
      %s161 = sadd.s32 %s160, 1
      %s162 = scalar_select %p159, %s160, %s161
      %p165 = pneg %p159
      %p166 = scmp.eq.s32.totalorder %s20, 3
      %p167 = por %p165, %p166
      %p168 = scmp.ne.s32.totalorder %s160, %s163
      %p169 = scmp.eq.s32.totalorder %s20, 0
      %p170 = por %p168, %p169
      %p171 = scmp.ne.s32.totalorder %s160, %s163
      %p172 = scmp.eq.s32.totalorder %s25, 3
      %p173 = por %p171, %p172
      %p174 = scmp.ne.s32.totalorder %s163, %s164
      %p175 = scmp.eq.s32.totalorder %s25, 0
      %p176 = por %p174, %p175
      %p177 = scmp.ne.s32.totalorder %s163, %s164
      %p178 = scmp.eq.s32.totalorder %s26, 3
      %p179 = por %p177, %p178
      %p181 = scmp.ne.s32.totalorder %s164, %s180
      %p182 = scmp.eq.s32.totalorder %s26, 0
      %p183 = por %p181, %p182
      %s184 = ssub.s32 %s27, %s39
      %p185 = scmp.eq.s32.totalorder %s184, 0
      %s187 = sadd.s32 %s186, 1
      %s188 = scalar_select %p185, %s186, %s187
      %p191 = pneg %p185
      %p192 = scmp.eq.s32.totalorder %s20, 3
      %p193 = por %p191, %p192
      %p194 = scmp.ne.s32.totalorder %s186, %s189
      %p195 = scmp.eq.s32.totalorder %s20, 0
      %p196 = por %p194, %p195
      %p197 = scmp.ne.s32.totalorder %s186, %s189
      %p198 = scmp.eq.s32.totalorder %s25, 3
      %p199 = por %p197, %p198
      %p200 = scmp.ne.s32.totalorder %s189, %s190
      %p201 = scmp.eq.s32.totalorder %s25, 0
      %p202 = por %p200, %p201
      %p203 = scmp.ne.s32.totalorder %s189, %s190
      %p204 = scmp.eq.s32.totalorder %s26, 3
      %p205 = por %p203, %p204
      %p207 = scmp.ne.s32.totalorder %s190, %s206
      %p208 = scmp.eq.s32.totalorder %s26, 0
      %p209 = por %p207, %p208
      %s210 = ssub.s32 %s27, %s39
      %p211 = scmp.eq.s32.totalorder %s210, 0
      %s213 = sadd.s32 %s212, 1
      %s214 = scalar_select %p211, %s212, %s213
      %p217 = pneg %p211
      %p218 = scmp.eq.s32.totalorder %s20, 3
      %p219 = por %p217, %p218
      %p220 = scmp.ne.s32.totalorder %s212, %s215
      %p221 = scmp.eq.s32.totalorder %s20, 0
      %p222 = por %p220, %p221
      %p223 = scmp.ne.s32.totalorder %s212, %s215
      %p224 = scmp.eq.s32.totalorder %s25, 3
      %p225 = por %p223, %p224
      %p226 = scmp.ne.s32.totalorder %s215, %s216
      %p227 = scmp.eq.s32.totalorder %s25, 0
      %p228 = por %p226, %p227
      %p229 = scmp.ne.s32.totalorder %s215, %s216
      %p230 = scmp.eq.s32.totalorder %s26, 3
      %p231 = por %p229, %p230
      %p233 = scmp.ne.s32.totalorder %s216, %s232
      %p234 = scmp.eq.s32.totalorder %s26, 0
      %p235 = por %p233, %p234
      %p236 = scmp.le.s32.totalorder 1, %s20
      %p237 = scmp.lt.s32.totalorder %s20, 5
      %p238 = pnand %p236, %p237
      %p239 = pneg %p238
      // Predicated region
      $region9: #{tpu_custom_call.1} parent=5 // pred_check
        _
      $region10: #{tpu_custom_call.1} parent=5 // pred_check_branch
        %241 = sbr.rel (%p238) target = $region12
      $region11: #{tpu_custom_call.1} parent=5 // pred_region
        %s242 = ssub.s32 %s20, 1
        // Predicated region
        $region13: #{tpu_custom_call.1} parent=11 // pred_check
          %p243 = pneg %p87
        $region14: #{tpu_custom_call.1} parent=11 // pred_check_branch
          %245 = sbr.rel (%p243) target = $region16
        $region15: #{tpu_custom_call.1} parent=11 // pred_region
          _
        $region16: #{tpu_custom_call.1} parent=11 // pred_fallthru
          _
        // Predicated region
        $region17: #{tpu_custom_call.1} parent=11 // pred_check
          %p246 = pneg %p108
        $region18: #{tpu_custom_call.1} parent=11 // pred_check_branch
          %248 = sbr.rel (%p246) target = $region20
        $region19: #{tpu_custom_call.1} parent=11 // pred_region
          _
        $region20: #{tpu_custom_call.1} parent=11 // pred_fallthru
          _
        // Predicated region
        $region21: #{tpu_custom_call.1} parent=11 // pred_check
          %p249 = pneg %p129
        $region22: #{tpu_custom_call.1} parent=11 // pred_check_branch
          %251 = sbr.rel (%p249) target = $region24
        $region23: #{tpu_custom_call.1} parent=11 // pred_region
          _
        $region24: #{tpu_custom_call.1} parent=11 // pred_fallthru
          _
        // Predicated region
        $region25: #{tpu_custom_call.1} parent=11 // pred_check
          %p252 = pneg %p150
        $region26: #{tpu_custom_call.1} parent=11 // pred_check_branch
          %254 = sbr.rel (%p252) target = $region28
        $region27: #{tpu_custom_call.1} parent=11 // pred_region
          _
        $region28: #{tpu_custom_call.1} parent=11 // pred_fallthru
          _
      $region12: #{tpu_custom_call.1} parent=5 // pred_fallthru
        _
      %p255 = scmp.lt.s32.totalorder %s20, 4
      // Predicated region
      $region29: #{tpu_custom_call.1} parent=5 // pred_check
        %p256 = pneg %p255
      $region30: #{tpu_custom_call.1} parent=5 // pred_check_branch
        %258 = sbr.rel (%p256) target = $region32
      $region31: #{tpu_custom_call.1} parent=5 // pred_region
        // Predicated region
        $region33: #{tpu_custom_call.1} parent=31 // pred_check
          %p259 = pneg %p60
        $region34: #{tpu_custom_call.1} parent=31 // pred_check_branch
          %261 = sbr.rel (%p259) target = $region36
        $region35: #{tpu_custom_call.1} parent=31 // pred_region
          %s262 = smul.u32 %s27, 4
          %s263 = sadd.s32 %s262, %s28
          %p264 = scmp.lt.s32.totalorder %s263, 3
          %s265 = scalar_select %p264, %s263, 3
          %s266 = smul.u32 2, %s265
          %s267 = ssub.s32 7, %s266
          %p268 = scmp.lt.s32.totalorder %s267, 2
          %s269 = scalar_select %p268, %s267, 2
          %s270 = smul.u32 128, %s269
          %p271 = scmp.lt.s32.totalorder %s266, 6
          %s272 = scalar_select %p271, %s266, 6
          %s273 = smul.addr %s272, 8
          %s274 = scalar_lea.vmem %s1, %s273
          %s275 = smul.u32 %s27, 4
          %s276 = sadd.s32 %s275, %s28
          %p277 = scmp.lt.s32.totalorder %s276, 3
          %s278 = scalar_select %p277, %s276, 3
          %s279 = smul.u32 2, %s278
          %s280 = ssub.s32 7, %s279
          %p281 = scmp.lt.s32.totalorder %s280, 2
          %s282 = scalar_select %p281, %s280, 2
          %s283 = smul.u32 128, %s282
        $region36: #{tpu_custom_call.1} parent=31 // pred_fallthru
          _
      $region32: #{tpu_custom_call.1} parent=5 // pred_fallthru
        _
      %p284 = scmp.le.s32.totalorder 1, %s20
      %p285 = scmp.lt.s32.totalorder %s20, 5
      %p286 = pnand %p284, %p285
      %p287 = pneg %p286
      // Predicated region
      $region37: #{tpu_custom_call.1} parent=5 // pred_check
        _
      $region38: #{tpu_custom_call.1} parent=5 // pred_check_branch
        %289 = sbr.rel (%p286) target = $region40
      $region39: #{tpu_custom_call.1} parent=5 // pred_region
        %s290 = ssub.s32 %s20, 1
        %s291 = smul.u32 %s29, 4
        %s292 = sadd.s32 %s291, %s30
        %p293 = scmp.lt.s32.totalorder %s292, 3
        %s294 = scalar_select %p293, %s292, 3
        %s295 = smul.u32 2, %s294
        %s296 = ssub.s32 7, %s295
        %p297 = scmp.lt.s32.totalorder %s296, 2
        %s298 = scalar_select %p297, %s296, 2
        %s299 = smul.u32 128, %s298
        %p300 = scmp.lt.s32.totalorder %s295, 6
        %s301 = scalar_select %p300, %s295, 6
        %s302 = smul.addr %s301, 8
        %s303 = scalar_lea.vmem %s1, %s302
        %p304 = pneg %p66
        %p305 = pneg %p63
        %p306 = pneg %p87
        %p307 = pneg %p84
        %p308 = pneg %p108
        %p309 = pneg %p105
        %p310 = pneg %p129
        %p311 = pneg %p126
        %p312 = pneg %p150
        %p313 = pneg %p147
        %p314 = pneg %p176
        %p315 = pneg %p173
        %p316 = pneg %p202
        %p317 = pneg %p199
        %p318 = pneg %p228
        %p319 = pneg %p225
        %s320 = smul.u32 %s29, 4
        %s321 = sadd.s32 %s320, %s30
        %p322 = scmp.lt.s32.totalorder %s321, 3
        %s323 = scalar_select %p322, %s321, 3
        %s324 = smul.u32 2, %s323
        %s325 = ssub.s32 7, %s324
        %p326 = scmp.lt.s32.totalorder %s325, 2
        %s327 = scalar_select %p326, %s325, 2
        %s328 = smul.u32 128, %s327
        %p329 = scmp.lt.s32.totalorder %s324, 6
        %s330 = scalar_select %p329, %s324, 6
        %s331 = smul.addr %s330, 8
        %s332 = scalar_lea.vmem %s1, %s331
        %s333 = smul.u32 %s29, 4
        %s334 = sadd.s32 %s333, %s30
        %p335 = scmp.lt.s32.totalorder %s334, 3
        %s336 = scalar_select %p335, %s334, 3
        %s337 = smul.u32 2, %s336
        %s338 = ssub.s32 7, %s337
        %p339 = scmp.lt.s32.totalorder %s338, 2
        %s340 = scalar_select %p339, %s338, 2
        %s341 = smul.u32 128, %s340
        %s342 = sld [smem:[#allocation3]]
        %s343 = smul.u32 %s29, 4
        %s344 = sadd.s32 %s343, %s30
        %s345 = smul.u32 %s344, 16
        %p346 = scmp.eq.s32.totalorder %s30, 0
        // Predicated region
        $region41: #{tpu_custom_call.1} parent=39 // pred_check
          %p347 = pneg %p346
        $region42: #{tpu_custom_call.1} parent=39 // pred_check_branch
          %349 = sbr.rel (%p347) target = $region44
        $region43: #{tpu_custom_call.1} parent=39 // pred_region
          %vm350 = vcmask 0
          %351 = vst.msk [vmem:[#allocation5] sm:$0x1] %vm350, -inf
          %352 = vst.msk [vmem:[#allocation7] sm:$0x1] %vm350, 0.0
          %vm353 = vcmask 253952
          %354 = vst.msk [vmem:[#allocation9] sm:$0x1] %vm353, 0.0
        $region44: #{tpu_custom_call.1} parent=39 // pred_fallthru
          _
        %s355 = sadd.s32 %s345, 16
        %p356 = scmp.le.s32.totalorder %s355, %s342
        // Predicated region
        $region45: #{tpu_custom_call.1} parent=39 // pred_check
          %p357 = pneg %p356
        $region46: #{tpu_custom_call.1} parent=39 // pred_check_branch
          %359 = sbr.rel (%p357) target = $region48
        $region47: #{tpu_custom_call.1} parent=39 // pred_region
          %v360 = vld [vmem:[%s332] sm:$0xff]
          %v361 = vld [vmem:[%s332 + $0x8] sm:$0xff]
          %v362 = vld [vmem:[%s2] sm:$0xff]
          %v363 = vld [vmem:[%s2 + $0x8] sm:$0xff]
          %v364 = vld [vmem:[%s2 + $0x10] sm:$0xff]
          %v365 = vld [vmem:[%s2 + $0x18] sm:$0xff]
          %v366 = vld [vmem:[%s2 + $0x20] sm:$0xff]
          %v367 = vld [vmem:[%s2 + $0x28] sm:$0xff]
          %v368 = vld [vmem:[%s2 + $0x30] sm:$0xff]
          %v369 = vld [vmem:[%s2 + $0x38] sm:$0xff]
          %v370 = vld [vmem:[%s3] sm:$0x3]
          %v372 = vlaneseq
          %v373 = vshrl.u32 %v372, 7
          %v374 = vsub.s32 0, %v373
          %v375 = vrot.slane %v370, %v374
          %v376 = vlaneseq
          %v377 = vshrl.u32 %v376, 7
          %v378 = vsub.s32 1, %v377
          %v379 = vrot.slane %v370, %v378
          %vm382 = vcmask 261120
          %v384 = vsel %vm382, %v360, 0
          %v387 = vsel %vm382, %v361, 0
          %389 = vmatprep.subr.mxu0 %v363
          %390 = vmatpush1.msra.mxu0 %v362
          %391 = vmatprep.subr.mxu0 %v365
          %392 = vmatpush1.msra.mxu0 %v364
          %393 = vmatprep.subr.mxu0 %v367
          %394 = vmatpush1.msra.mxu0 %v366
          %395 = vmatprep.subr.mxu0 %v369
          %396 = vmatpush1.msra.mxu0 %v368
          %397 = vmatprep.subr.mxu0 0.0
          %398 = vmatpush1.msra.mxu0 0.0
          %399 = vmatprep.subr.mxu0 0.0
          %400 = vmatpush1.msra.mxu0 0.0
          %401 = vmatprep.subr.mxu0 0.0
          %402 = vmatpush1.msra.mxu0 0.0
          %403 = vmatprep.subr.mxu0 0.0
          %404 = vmatpush1.msra.mxu0 0.0
          %405 = vmatprep.subr.mxu0 0.0
          %406 = vmatpush1.msra.mxu0 0.0
          %407 = vmatprep.subr.mxu0 0.0
          %408 = vmatpush1.msra.mxu0 0.0
          %409 = vmatprep.subr.mxu0 0.0
          %410 = vmatpush1.msra.mxu0 0.0
          %411 = vmatprep.subr.mxu0 0.0
          %412 = vmatpush1.msra.mxu0 0.0
          %413 = vmatprep.subr.mxu0 0.0
          %414 = vmatpush1.msra.mxu0 0.0
          %415 = vmatprep.subr.mxu0 0.0
          %416 = vmatpush1.msra.mxu0 0.0
          %417 = vmatprep.subr.mxu0 0.0
          %418 = vmatpush1.msra.mxu0 0.0
          %419 = vmatprep.subr.mxu0 0.0
          %420 = vmatpush1.msra.mxu0 0.0
          %421 = vmatprep.subr.mxu0 0.0
          %422 = vmatpush1.msra.mxu0 0.0
          %423 = vmatprep.subr.mxu0 0.0
          %424 = vmatpush1.msra.mxu0 0.0
          %425 = vmatprep.subr.mxu0 0.0
          %426 = vmatpush1.msra.mxu0 0.0
          %427 = vmatprep.subr.mxu0 0.0
          %428 = vmatpush1.msra.mxu0 0.0
          %429 = vmatprep.subr.mxu0 0.0
          %430 = vmatpush1.msra.mxu0 0.0
          %431 = vmatprep.subr.mxu0 0.0
          %432 = vmatpush1.msra.mxu0 0.0
          %433 = vmatprep.subr.mxu0 0.0
          %434 = vmatpush1.msra.mxu0 0.0
          %435 = vmatprep.subr.mxu0 0.0
          %436 = vmatpush1.msra.mxu0 0.0
          %437 = vmatprep.subr.mxu0 0.0
          %438 = vmatpush1.msra.mxu0 0.0
          %439 = vmatprep.subr.mxu0 0.0
          %440 = vmatpush1.msra.mxu0 0.0
          %441 = vmatprep.subr.mxu0 0.0
          %442 = vmatpush1.msra.mxu0 0.0
          %443 = vmatprep.subr.mxu0 0.0
          %444 = vmatpush1.msra.mxu0 0.0
          %445 = vmatprep.subr.mxu0 0.0
          %446 = vmatpush1.msra.mxu0 0.0
          %447 = vmatprep.subr.mxu0 0.0
          %448 = vmatpush1.msra.mxu0 0.0
          %449 = vmatprep.subr.mxu0 0.0
          %450 = vmatpush1.msra.mxu0 0.0
          %451 = vmatprep.subr.mxu0 0.0
          %452 = vmatpush1.msra.mxu0 0.0
          %453 = vmatprep.mubr.f32.mxu0 0.0
          %454 = vmatmul.mubr.f32.gmra.mrb[0].mxu0 %v384
          %v455 = vpop.f32.mrb[0].mxu0
          %v456 = vadd.f32 %v375, %v455
          %v457 = vpop.f32.mrb[0].mxu0
          %v458 = vadd.f32 %v379, %v457
          %459 = vmatprep.mubr.f32.mxu0 0.0
          %460 = vmatmul.mubr.f32.gmra.mrb[0].mxu0 %v387
          %v461 = vpop.f32.mrb[0].mxu0
          %v462 = vadd.f32 %v375, %v461
          %v463 = vpop.f32.mrb[0].mxu0
          %v464 = vadd.f32 %v379, %v463
          %465 = vdwg.mxu0
          %v466 = vtanh.pop %v456
          %v467 = vtanh.pop %v462
          %v468 = vxor.u32 %v458, 2147483648
          %v469 = vxor.u32 %v464, 2147483648
          %v470 = vmul.f32 %v468, 1.442695
          %v471 = vpow.pop %v470
          %v472 = vmul.f32 %v469, 1.442695
          %v473 = vpow.pop %v472
          %v474 = vadd.f32 %v471, 1.0
          %v475 = vadd.f32 %v473, 1.0
          %v476 = vrcp.pop %v474
          %v477 = vmul.f32 1.0, %v476
          %v478 = vrcp.pop %v475
          %v479 = vmul.f32 1.0, %v478
          %v480 = vmul.f32 %v466, %v477
          %v481 = vmul.f32 %v467, %v479
          %v482 = vld [vmem:[%s4] sm:$0x1]
          %v483 = vld [vmem:[#allocation4] sm:$0x1]
          %485 = vset.pattern.permute.xlu0 0
          %486 = vperm.xlu0 %485, %v483
          %v487 = vpop.permute.xlu0 %486
          %v489 = vlaneseq
          %v490 = vshrl.u32 %v489, 7
          %v491 = vsub.s32 0, %v490
          %v492 = vrot.slane %v487, %v491
          %493 = vmatprep.subr.mxu0 0.0
          %494 = vmatpush1.xpose.msra.mxu0 %v480
          %495 = vmatprep.subr.mxu0 0.0
          %496 = vmatpush1.xpose.msra.mxu0 %v481
          %497 = vmatprep.subr.mxu0 0.0
          %498 = vmatpush1.xpose.msra.mxu0 0.0
          %499 = vmatprep.subr.mxu0 0.0
          %500 = vmatpush1.xpose.msra.mxu0 0.0
          %501 = vmatprep.subr.mxu0 0.0
          %502 = vmatpush1.xpose.msra.mxu0 0.0
          %503 = vmatprep.subr.mxu0 0.0
          %504 = vmatpush1.xpose.msra.mxu0 0.0
          %505 = vmatprep.subr.mxu0 0.0
          %506 = vmatpush1.xpose.msra.mxu0 0.0
          %507 = vmatprep.subr.mxu0 0.0
          %508 = vmatpush1.xpose.msra.mxu0 0.0
          %509 = vmatprep.subr.mxu0 0.0
          %510 = vmatpush1.xpose.msra.mxu0 0.0
          %511 = vmatprep.subr.mxu0 0.0
          %512 = vmatpush1.xpose.msra.mxu0 0.0
          %513 = vmatprep.subr.mxu0 0.0
          %514 = vmatpush1.xpose.msra.mxu0 0.0
          %515 = vmatprep.subr.mxu0 0.0
          %516 = vmatpush1.xpose.msra.mxu0 0.0
          %517 = vmatprep.subr.mxu0 0.0
          %518 = vmatpush1.xpose.msra.mxu0 0.0
          %519 = vmatprep.subr.mxu0 0.0
          %520 = vmatpush1.xpose.msra.mxu0 0.0
          %521 = vmatprep.subr.mxu0 0.0
          %522 = vmatpush1.xpose.msra.mxu0 0.0
          %523 = vmatprep.subr.mxu0 0.0
          %524 = vmatpush1.xpose.msra.mxu0 0.0
          %525 = vmatprep.subr.mxu0 0.0
          %526 = vmatpush1.xpose.msra.mxu0 0.0
          %527 = vmatprep.subr.mxu0 0.0
          %528 = vmatpush1.xpose.msra.mxu0 0.0
          %529 = vmatprep.subr.mxu0 0.0
          %530 = vmatpush1.xpose.msra.mxu0 0.0
          %531 = vmatprep.subr.mxu0 0.0
          %532 = vmatpush1.xpose.msra.mxu0 0.0
          %533 = vmatprep.subr.mxu0 0.0
          %534 = vmatpush1.xpose.msra.mxu0 0.0
          %535 = vmatprep.subr.mxu0 0.0
          %536 = vmatpush1.xpose.msra.mxu0 0.0
          %537 = vmatprep.subr.mxu0 0.0
          %538 = vmatpush1.xpose.msra.mxu0 0.0
          %539 = vmatprep.subr.mxu0 0.0
          %540 = vmatpush1.xpose.msra.mxu0 0.0
          %541 = vmatprep.subr.mxu0 0.0
          %542 = vmatpush1.xpose.msra.mxu0 0.0
          %543 = vmatprep.subr.mxu0 0.0
          %544 = vmatpush1.xpose.msra.mxu0 0.0
          %545 = vmatprep.subr.mxu0 0.0
          %546 = vmatpush1.xpose.msra.mxu0 0.0
          %547 = vmatprep.subr.mxu0 0.0
          %548 = vmatpush1.xpose.msra.mxu0 0.0
          %549 = vmatprep.subr.mxu0 0.0
          %550 = vmatpush1.xpose.msra.mxu0 0.0
          %551 = vmatprep.subr.mxu0 0.0
          %552 = vmatpush1.xpose.msra.mxu0 0.0
          %553 = vmatprep.subr.mxu0 0.0
          %554 = vmatpush1.xpose.msra.mxu0 0.0
          %555 = vmatprep.subr.mxu0 0.0
          %556 = vmatpush1.xpose.msra.mxu0 0.0
          %557 = vmatprep.mubr.f32.mxu0 0.0
          %558 = vmatmul.mubr.f32.gmra.mrb[0].mxu0 %v482
          %v559 = vpop.f32.mrb[0].mxu0
          %v560 = vadd.f32 %v492, %v559
          %v561 = vpop.f32.mrb[0].mxu0
          %562 = vdwg.mxu0
          %v563 = vld [vmem:[#allocation5] sm:$0x1]
          %vm564 = vcmask 122880
          %v565 = vsel %vm564, %v560, -inf
          %566 = vmax.xlane.f32.xlu0 %v565
          %v567 = vpop.xlane.xlu0 %566
          %v568 = vmax.f32 %v563, %v567
          %v569 = vsub.f32 %v563, %v568
          %v570 = vmul.f32 %v569, 1.442695
          %v571 = vpow.pop %v570
          %573 = vset.pattern.permute.xlu0 0
          %574 = vperm.xlu0 %573, %v568
          %v575 = vpop.permute.xlu0 %574
          %v577 = vlaneseq
          %v578 = vshrl.u32 %v577, 7
          %v579 = vsub.s32 0, %v578
          %v580 = vrot.slane %v575, %v579
          %v581 = vsub.f32 %v560, %v580
          %v582 = vmul.f32 %v581, 1.442695
          %v583 = vpow.pop %v582
          %v584 = vld [vmem:[#allocation7] sm:$0x1]
          %v585 = vmul.f32 %v571, %v584
          %v586 = vsel %vm564, %v583, 0.0
          %587 = vadd.xlane.f32.xlu0 %v586
          %v588 = vpop.xlane.xlu0 %587
          %v589 = vadd.f32 %v585, %v588
          %vm590 = vcmask 0
          %591 = vst.msk [vmem:[#allocation7] sm:$0x1] %vm590, %v589
          %v592 = vld [vmem:[#allocation9] sm:$0x1]
          %594 = vset.pattern.permute.xlu0 0
          %595 = vperm.xlu0 %594, %v571
          %v596 = vpop.permute.xlu0 %595
          %v598 = vlaneseq
          %v599 = vshrl.u32 %v598, 7
          %v600 = vsub.s32 0, %v599
          %v601 = vrot.slane %v596, %v600
          %v602 = vmul.f32 %v601, %v592
          %vm603 = vcmask 130048
          %v605 = vsel %vm603, %v583, 0
          %607 = vmatprep.subr.mxu0 0.0
          %608 = vmatpush1.msra.mxu0 %v360
          %609 = vmatprep.subr.mxu0 0.0
          %610 = vmatpush1.msra.mxu0 %v361
          %611 = vmatprep.subr.mxu0 0.0
          %612 = vmatpush1.msra.mxu0 0.0
          %613 = vmatprep.subr.mxu0 0.0
          %614 = vmatpush1.msra.mxu0 0.0
          %615 = vmatprep.subr.mxu0 0.0
          %616 = vmatpush1.msra.mxu0 0.0
          %617 = vmatprep.subr.mxu0 0.0
          %618 = vmatpush1.msra.mxu0 0.0
          %619 = vmatprep.subr.mxu0 0.0
          %620 = vmatpush1.msra.mxu0 0.0
          %621 = vmatprep.subr.mxu0 0.0
          %622 = vmatpush1.msra.mxu0 0.0
          %623 = vmatprep.subr.mxu0 0.0
          %624 = vmatpush1.msra.mxu0 0.0
          %625 = vmatprep.subr.mxu0 0.0
          %626 = vmatpush1.msra.mxu0 0.0
          %627 = vmatprep.subr.mxu0 0.0
          %628 = vmatpush1.msra.mxu0 0.0
          %629 = vmatprep.subr.mxu0 0.0
          %630 = vmatpush1.msra.mxu0 0.0
          %631 = vmatprep.subr.mxu0 0.0
          %632 = vmatpush1.msra.mxu0 0.0
          %633 = vmatprep.subr.mxu0 0.0
          %634 = vmatpush1.msra.mxu0 0.0
          %635 = vmatprep.subr.mxu0 0.0
          %636 = vmatpush1.msra.mxu0 0.0
          %637 = vmatprep.subr.mxu0 0.0
          %638 = vmatpush1.msra.mxu0 0.0
          %639 = vmatprep.subr.mxu0 0.0
          %640 = vmatpush1.msra.mxu0 0.0
          %641 = vmatprep.subr.mxu0 0.0
          %642 = vmatpush1.msra.mxu0 0.0
          %643 = vmatprep.subr.mxu0 0.0
          %644 = vmatpush1.msra.mxu0 0.0
          %645 = vmatprep.subr.mxu0 0.0
          %646 = vmatpush1.msra.mxu0 0.0
          %647 = vmatprep.subr.mxu0 0.0
          %648 = vmatpush1.msra.mxu0 0.0
          %649 = vmatprep.subr.mxu0 0.0
          %650 = vmatpush1.msra.mxu0 0.0
          %651 = vmatprep.subr.mxu0 0.0
          %652 = vmatpush1.msra.mxu0 0.0
          %653 = vmatprep.subr.mxu0 0.0
          %654 = vmatpush1.msra.mxu0 0.0
          %655 = vmatprep.subr.mxu0 0.0
          %656 = vmatpush1.msra.mxu0 0.0
          %657 = vmatprep.subr.mxu0 0.0
          %658 = vmatpush1.msra.mxu0 0.0
          %659 = vmatprep.subr.mxu0 0.0
          %660 = vmatpush1.msra.mxu0 0.0
          %661 = vmatprep.subr.mxu0 0.0
          %662 = vmatpush1.msra.mxu0 0.0
          %663 = vmatprep.subr.mxu0 0.0
          %664 = vmatpush1.msra.mxu0 0.0
          %665 = vmatprep.subr.mxu0 0.0
          %666 = vmatpush1.msra.mxu0 0.0
          %667 = vmatprep.subr.mxu0 0.0
          %668 = vmatpush1.msra.mxu0 0.0
          %669 = vmatprep.subr.mxu0 0.0
          %670 = vmatpush1.msra.mxu0 0.0
          %671 = vmatprep.mubr.f32.mxu0 0.0
          %672 = vmatmul.mubr.f32.gmra.mrb[0].mxu0 %v605
          %v673 = vpop.f32.mrb[0].mxu0
          %v674 = vadd.f32 0.0, %v673
          %v675 = vpop.f32.mrb[0].mxu0
          %676 = vdwg.mxu0
          %v677 = vadd.f32 %v602, %v674
          %vm678 = vcmask 253952
          %679 = vst.msk [vmem:[#allocation9] sm:$0x1] %vm678, %v677
          %680 = vst.msk [vmem:[#allocation5] sm:$0x1] %vm590, %v568
        $region48: #{tpu_custom_call.1} parent=39 // pred_fallthru
          _
        %p681 = scmp.lt.s32.totalorder %s345, %s342
        %p682 = scmp.gt.s32.totalorder %s355, %s342
        %p683 = pnand %p681, %p682
        %p684 = pneg %p683
        // Predicated region
        $region49: #{tpu_custom_call.1} parent=39 // pred_check
          _
        $region50: #{tpu_custom_call.1} parent=39 // pred_check_branch
          %686 = sbr.rel (%p683) target = $region52
        $region51: #{tpu_custom_call.1} parent=39 // pred_region
          %v687 = vld [vmem:[%s332] sm:$0xff]
          %v688 = vld [vmem:[%s332 + $0x8] sm:$0xff]
          %v689 = vld [vmem:[%s2] sm:$0xff]
          %v690 = vld [vmem:[%s2 + $0x8] sm:$0xff]
          %v691 = vld [vmem:[%s2 + $0x10] sm:$0xff]
          %v692 = vld [vmem:[%s2 + $0x18] sm:$0xff]
          %v693 = vld [vmem:[%s2 + $0x20] sm:$0xff]
          %v694 = vld [vmem:[%s2 + $0x28] sm:$0xff]
          %v695 = vld [vmem:[%s2 + $0x30] sm:$0xff]
          %v696 = vld [vmem:[%s2 + $0x38] sm:$0xff]
          %v697 = vld [vmem:[%s3] sm:$0x3]
          %v699 = vlaneseq
          %v700 = vshrl.u32 %v699, 7
          %v701 = vsub.s32 0, %v700
          %v702 = vrot.slane %v697, %v701
          %v703 = vlaneseq
          %v704 = vshrl.u32 %v703, 7
          %v705 = vsub.s32 1, %v704
          %v706 = vrot.slane %v697, %v705
          %vm709 = vcmask 261120
          %v711 = vsel %vm709, %v687, 0
          %v714 = vsel %vm709, %v688, 0
          %716 = vmatprep.subr.mxu0 %v690
          %717 = vmatpush1.msra.mxu0 %v689
          %718 = vmatprep.subr.mxu0 %v692
          %719 = vmatpush1.msra.mxu0 %v691
          %720 = vmatprep.subr.mxu0 %v694
          %721 = vmatpush1.msra.mxu0 %v693
          %722 = vmatprep.subr.mxu0 %v696
          %723 = vmatpush1.msra.mxu0 %v695
          %724 = vmatprep.subr.mxu0 0.0
          %725 = vmatpush1.msra.mxu0 0.0
          %726 = vmatprep.subr.mxu0 0.0
          %727 = vmatpush1.msra.mxu0 0.0
          %728 = vmatprep.subr.mxu0 0.0
          %729 = vmatpush1.msra.mxu0 0.0
          %730 = vmatprep.subr.mxu0 0.0
          %731 = vmatpush1.msra.mxu0 0.0
          %732 = vmatprep.subr.mxu0 0.0
          %733 = vmatpush1.msra.mxu0 0.0
          %734 = vmatprep.subr.mxu0 0.0
          %735 = vmatpush1.msra.mxu0 0.0
          %736 = vmatprep.subr.mxu0 0.0
          %737 = vmatpush1.msra.mxu0 0.0
          %738 = vmatprep.subr.mxu0 0.0
          %739 = vmatpush1.msra.mxu0 0.0
          %740 = vmatprep.subr.mxu0 0.0
          %741 = vmatpush1.msra.mxu0 0.0
          %742 = vmatprep.subr.mxu0 0.0
          %743 = vmatpush1.msra.mxu0 0.0
          %744 = vmatprep.subr.mxu0 0.0
          %745 = vmatpush1.msra.mxu0 0.0
          %746 = vmatprep.subr.mxu0 0.0
          %747 = vmatpush1.msra.mxu0 0.0
          %748 = vmatprep.subr.mxu0 0.0
          %749 = vmatpush1.msra.mxu0 0.0
          %750 = vmatprep.subr.mxu0 0.0
          %751 = vmatpush1.msra.mxu0 0.0
          %752 = vmatprep.subr.mxu0 0.0
          %753 = vmatpush1.msra.mxu0 0.0
          %754 = vmatprep.subr.mxu0 0.0
          %755 = vmatpush1.msra.mxu0 0.0
          %756 = vmatprep.subr.mxu0 0.0
          %757 = vmatpush1.msra.mxu0 0.0
          %758 = vmatprep.subr.mxu0 0.0
          %759 = vmatpush1.msra.mxu0 0.0
          %760 = vmatprep.subr.mxu0 0.0
          %761 = vmatpush1.msra.mxu0 0.0
          %762 = vmatprep.subr.mxu0 0.0
          %763 = vmatpush1.msra.mxu0 0.0
          %764 = vmatprep.subr.mxu0 0.0
          %765 = vmatpush1.msra.mxu0 0.0
          %766 = vmatprep.subr.mxu0 0.0
          %767 = vmatpush1.msra.mxu0 0.0
          %768 = vmatprep.subr.mxu0 0.0
          %769 = vmatpush1.msra.mxu0 0.0
          %770 = vmatprep.subr.mxu0 0.0
          %771 = vmatpush1.msra.mxu0 0.0
          %772 = vmatprep.subr.mxu0 0.0
          %773 = vmatpush1.msra.mxu0 0.0
          %774 = vmatprep.subr.mxu0 0.0
          %775 = vmatpush1.msra.mxu0 0.0
          %776 = vmatprep.subr.mxu0 0.0
          %777 = vmatpush1.msra.mxu0 0.0
          %778 = vmatprep.subr.mxu0 0.0
          %779 = vmatpush1.msra.mxu0 0.0
          %780 = vmatprep.mubr.f32.mxu0 0.0
          %781 = vmatmul.mubr.f32.gmra.mrb[0].mxu0 %v711
          %v782 = vpop.f32.mrb[0].mxu0
          %v783 = vadd.f32 %v702, %v782
          %v784 = vpop.f32.mrb[0].mxu0
          %v785 = vadd.f32 %v706, %v784
          %786 = vmatprep.mubr.f32.mxu0 0.0
          %787 = vmatmul.mubr.f32.gmra.mrb[0].mxu0 %v714
          %v788 = vpop.f32.mrb[0].mxu0
          %v789 = vadd.f32 %v702, %v788
          %v790 = vpop.f32.mrb[0].mxu0
          %v791 = vadd.f32 %v706, %v790
          %792 = vdwg.mxu0
          %v793 = vtanh.pop %v783
          %v794 = vtanh.pop %v789
          %v795 = vxor.u32 %v785, 2147483648
          %v796 = vxor.u32 %v791, 2147483648
          %v797 = vmul.f32 %v795, 1.442695
          %v798 = vpow.pop %v797
          %v799 = vmul.f32 %v796, 1.442695
          %v800 = vpow.pop %v799
          %v801 = vadd.f32 %v798, 1.0
          %v802 = vadd.f32 %v800, 1.0
          %v803 = vrcp.pop %v801
          %v804 = vmul.f32 1.0, %v803
          %v805 = vrcp.pop %v802
          %v806 = vmul.f32 1.0, %v805
          %v807 = vmul.f32 %v793, %v804
          %v808 = vmul.f32 %v794, %v806
          %v809 = vld [vmem:[%s4] sm:$0x1]
          %v810 = vld [vmem:[#allocation4] sm:$0x1]
          %812 = vset.pattern.permute.xlu0 0
          %813 = vperm.xlu0 %812, %v810
          %v814 = vpop.permute.xlu0 %813
          %v816 = vlaneseq
          %v817 = vshrl.u32 %v816, 7
          %v818 = vsub.s32 0, %v817
          %v819 = vrot.slane %v814, %v818
          %820 = vmatprep.subr.mxu0 0.0
          %821 = vmatpush1.xpose.msra.mxu0 %v807
          %822 = vmatprep.subr.mxu0 0.0
          %823 = vmatpush1.xpose.msra.mxu0 %v808
          %824 = vmatprep.subr.mxu0 0.0
          %825 = vmatpush1.xpose.msra.mxu0 0.0
          %826 = vmatprep.subr.mxu0 0.0
          %827 = vmatpush1.xpose.msra.mxu0 0.0
          %828 = vmatprep.subr.mxu0 0.0
          %829 = vmatpush1.xpose.msra.mxu0 0.0
          %830 = vmatprep.subr.mxu0 0.0
          %831 = vmatpush1.xpose.msra.mxu0 0.0
          %832 = vmatprep.subr.mxu0 0.0
          %833 = vmatpush1.xpose.msra.mxu0 0.0
          %834 = vmatprep.subr.mxu0 0.0
          %835 = vmatpush1.xpose.msra.mxu0 0.0
          %836 = vmatprep.subr.mxu0 0.0
          %837 = vmatpush1.xpose.msra.mxu0 0.0
          %838 = vmatprep.subr.mxu0 0.0
          %839 = vmatpush1.xpose.msra.mxu0 0.0
          %840 = vmatprep.subr.mxu0 0.0
          %841 = vmatpush1.xpose.msra.mxu0 0.0
          %842 = vmatprep.subr.mxu0 0.0
          %843 = vmatpush1.xpose.msra.mxu0 0.0
          %844 = vmatprep.subr.mxu0 0.0
          %845 = vmatpush1.xpose.msra.mxu0 0.0
          %846 = vmatprep.subr.mxu0 0.0
          %847 = vmatpush1.xpose.msra.mxu0 0.0
          %848 = vmatprep.subr.mxu0 0.0
          %849 = vmatpush1.xpose.msra.mxu0 0.0
          %850 = vmatprep.subr.mxu0 0.0
          %851 = vmatpush1.xpose.msra.mxu0 0.0
          %852 = vmatprep.subr.mxu0 0.0
          %853 = vmatpush1.xpose.msra.mxu0 0.0
          %854 = vmatprep.subr.mxu0 0.0
          %855 = vmatpush1.xpose.msra.mxu0 0.0
          %856 = vmatprep.subr.mxu0 0.0
          %857 = vmatpush1.xpose.msra.mxu0 0.0
          %858 = vmatprep.subr.mxu0 0.0
          %859 = vmatpush1.xpose.msra.mxu0 0.0
          %860 = vmatprep.subr.mxu0 0.0
          %861 = vmatpush1.xpose.msra.mxu0 0.0
          %862 = vmatprep.subr.mxu0 0.0
          %863 = vmatpush1.xpose.msra.mxu0 0.0
          %864 = vmatprep.subr.mxu0 0.0
          %865 = vmatpush1.xpose.msra.mxu0 0.0
          %866 = vmatprep.subr.mxu0 0.0
          %867 = vmatpush1.xpose.msra.mxu0 0.0
          %868 = vmatprep.subr.mxu0 0.0
          %869 = vmatpush1.xpose.msra.mxu0 0.0
          %870 = vmatprep.subr.mxu0 0.0
          %871 = vmatpush1.xpose.msra.mxu0 0.0
          %872 = vmatprep.subr.mxu0 0.0
          %873 = vmatpush1.xpose.msra.mxu0 0.0
          %874 = vmatprep.subr.mxu0 0.0
          %875 = vmatpush1.xpose.msra.mxu0 0.0
          %876 = vmatprep.subr.mxu0 0.0
          %877 = vmatpush1.xpose.msra.mxu0 0.0
          %878 = vmatprep.subr.mxu0 0.0
          %879 = vmatpush1.xpose.msra.mxu0 0.0
          %880 = vmatprep.subr.mxu0 0.0
          %881 = vmatpush1.xpose.msra.mxu0 0.0
          %882 = vmatprep.subr.mxu0 0.0
          %883 = vmatpush1.xpose.msra.mxu0 0.0
          %884 = vmatprep.mubr.f32.mxu0 0.0
          %885 = vmatmul.mubr.f32.gmra.mrb[0].mxu0 %v809
          %v886 = vpop.f32.mrb[0].mxu0
          %v887 = vadd.f32 %v819, %v886
          %v888 = vpop.f32.mrb[0].mxu0
          %889 = vdwg.mxu0
          %v890 = vlaneseq
          %v891 = vand.u32 %v890, 127
          %v892 = vstv %s345
          %v893 = vadd.s32 %v892, %v891
          %v894 = vstv %s342
          %vm895 = vcmp.lt.s32.totalorder %v893, %v894
          %v896 = vsel %vm895, %v887, -inf
          %v897 = vlaneseq
          %v898 = vshrl.u32 %v897, 7
          %v899 = vadd.s32 %v898, 8
          %v900 = vadd.s32 %v892, %v898
          %v901 = vadd.s32 %v892, %v899
          %vm902 = vcmp.lt.s32.totalorder %v900, %v894
          %vm903 = vcmp.lt.s32.totalorder %v901, %v894
          %v904 = vsel %vm902, %v687, 0.0
          %v905 = vsel %vm903, %v688, 0.0
          %v906 = vld [vmem:[#allocation5] sm:$0x1]
          %vm907 = vcmask 122880
          %v908 = vsel %vm907, %v896, -inf
          %909 = vmax.xlane.f32.xlu0 %v908
          %v910 = vpop.xlane.xlu0 %909
          %v911 = vmax.f32 %v906, %v910
          %v912 = vsub.f32 %v906, %v911
          %v913 = vmul.f32 %v912, 1.442695
          %v914 = vpow.pop %v913
          %916 = vset.pattern.permute.xlu0 0
          %917 = vperm.xlu0 %916, %v911
          %v918 = vpop.permute.xlu0 %917
          %v920 = vlaneseq
          %v921 = vshrl.u32 %v920, 7
          %v922 = vsub.s32 0, %v921
          %v923 = vrot.slane %v918, %v922
          %v924 = vsub.f32 %v896, %v923
          %v925 = vmul.f32 %v924, 1.442695
          %v926 = vpow.pop %v925
          %v927 = vld [vmem:[#allocation7] sm:$0x1]
          %v928 = vmul.f32 %v914, %v927
          %v929 = vsel %vm907, %v926, 0.0
          %930 = vadd.xlane.f32.xlu0 %v929
          %v931 = vpop.xlane.xlu0 %930
          %v932 = vadd.f32 %v928, %v931
          %vm933 = vcmask 0
          %934 = vst.msk [vmem:[#allocation7] sm:$0x1] %vm933, %v932
          %v935 = vld [vmem:[#allocation9] sm:$0x1]
          %937 = vset.pattern.permute.xlu0 0
          %938 = vperm.xlu0 %937, %v914
          %v939 = vpop.permute.xlu0 %938
          %v941 = vlaneseq
          %v942 = vshrl.u32 %v941, 7
          %v943 = vsub.s32 0, %v942
          %v944 = vrot.slane %v939, %v943
          %v945 = vmul.f32 %v944, %v935
          %vm946 = vcmask 130048
          %v948 = vsel %vm946, %v926, 0
          %950 = vmatprep.subr.mxu0 0.0
          %951 = vmatpush1.msra.mxu0 %v904
          %952 = vmatprep.subr.mxu0 0.0
          %953 = vmatpush1.msra.mxu0 %v905
          %954 = vmatprep.subr.mxu0 0.0
          %955 = vmatpush1.msra.mxu0 0.0
          %956 = vmatprep.subr.mxu0 0.0
          %957 = vmatpush1.msra.mxu0 0.0
          %958 = vmatprep.subr.mxu0 0.0
          %959 = vmatpush1.msra.mxu0 0.0
          %960 = vmatprep.subr.mxu0 0.0
          %961 = vmatpush1.msra.mxu0 0.0
          %962 = vmatprep.subr.mxu0 0.0
          %963 = vmatpush1.msra.mxu0 0.0
          %964 = vmatprep.subr.mxu0 0.0
          %965 = vmatpush1.msra.mxu0 0.0
          %966 = vmatprep.subr.mxu0 0.0
          %967 = vmatpush1.msra.mxu0 0.0
          %968 = vmatprep.subr.mxu0 0.0
          %969 = vmatpush1.msra.mxu0 0.0
          %970 = vmatprep.subr.mxu0 0.0
          %971 = vmatpush1.msra.mxu0 0.0
          %972 = vmatprep.subr.mxu0 0.0
          %973 = vmatpush1.msra.mxu0 0.0
          %974 = vmatprep.subr.mxu0 0.0
          %975 = vmatpush1.msra.mxu0 0.0
          %976 = vmatprep.subr.mxu0 0.0
          %977 = vmatpush1.msra.mxu0 0.0
          %978 = vmatprep.subr.mxu0 0.0
          %979 = vmatpush1.msra.mxu0 0.0
          %980 = vmatprep.subr.mxu0 0.0
          %981 = vmatpush1.msra.mxu0 0.0
          %982 = vmatprep.subr.mxu0 0.0
          %983 = vmatpush1.msra.mxu0 0.0
          %984 = vmatprep.subr.mxu0 0.0
          %985 = vmatpush1.msra.mxu0 0.0
          %986 = vmatprep.subr.mxu0 0.0
          %987 = vmatpush1.msra.mxu0 0.0
          %988 = vmatprep.subr.mxu0 0.0
          %989 = vmatpush1.msra.mxu0 0.0
          %990 = vmatprep.subr.mxu0 0.0
          %991 = vmatpush1.msra.mxu0 0.0
          %992 = vmatprep.subr.mxu0 0.0
          %993 = vmatpush1.msra.mxu0 0.0
          %994 = vmatprep.subr.mxu0 0.0
          %995 = vmatpush1.msra.mxu0 0.0
          %996 = vmatprep.subr.mxu0 0.0
          %997 = vmatpush1.msra.mxu0 0.0
          %998 = vmatprep.subr.mxu0 0.0
          %999 = vmatpush1.msra.mxu0 0.0
          %1000 = vmatprep.subr.mxu0 0.0
          %1001 = vmatpush1.msra.mxu0 0.0
          %1002 = vmatprep.subr.mxu0 0.0
          %1003 = vmatpush1.msra.mxu0 0.0
          %1004 = vmatprep.subr.mxu0 0.0
          %1005 = vmatpush1.msra.mxu0 0.0
          %1006 = vmatprep.subr.mxu0 0.0
          %1007 = vmatpush1.msra.mxu0 0.0
          %1008 = vmatprep.subr.mxu0 0.0
          %1009 = vmatpush1.msra.mxu0 0.0
          %1010 = vmatprep.subr.mxu0 0.0
          %1011 = vmatpush1.msra.mxu0 0.0
          %1012 = vmatprep.subr.mxu0 0.0
          %1013 = vmatpush1.msra.mxu0 0.0
          %1014 = vmatprep.mubr.f32.mxu0 0.0
          %1015 = vmatmul.mubr.f32.gmra.mrb[0].mxu0 %v948
          %v1016 = vpop.f32.mrb[0].mxu0
          %v1017 = vadd.f32 0.0, %v1016
          %v1018 = vpop.f32.mrb[0].mxu0
          %1019 = vdwg.mxu0
          %v1020 = vadd.f32 %v945, %v1017
          %vm1021 = vcmask 253952
          %1022 = vst.msk [vmem:[#allocation9] sm:$0x1] %vm1021, %v1020
          %1023 = vst.msk [vmem:[#allocation5] sm:$0x1] %vm933, %v911
        $region52: #{tpu_custom_call.1} parent=39 // pred_fallthru
          _
        // Predicated region
        $region53: #{tpu_custom_call.1} parent=39 // pred_check
          %p1024 = pneg %p173
        $region54: #{tpu_custom_call.1} parent=39 // pred_check_branch
          %1026 = sbr.rel (%p1024) target = $region56
        $region55: #{tpu_custom_call.1} parent=39 // pred_region
          %s1028 = ssub.s32 16, 16
          %1029 = vsyncadd [#allocation6], %s1028
          %s1030 = smul.addr %s29, 16
          %s1031 = scalar_lea.hbm %s6, %s1030
          %s1033 = sshll.u32 [#allocation5], 4
          %s1034 = int_to_ptr.vmem [resolvable:$true] %s1033
          %1036 = dma.vmem_to_hbm [thread:$0]  %s1034, 16, %s1031, [#allocation6]
        $region56: #{tpu_custom_call.1} parent=39 // pred_fallthru
          _
        // Predicated region
        $region57: #{tpu_custom_call.1} parent=39 // pred_check
          %p1037 = pneg %p199
        $region58: #{tpu_custom_call.1} parent=39 // pred_check_branch
          %1039 = sbr.rel (%p1037) target = $region60
        $region59: #{tpu_custom_call.1} parent=39 // pred_region
          %s1041 = ssub.s32 16, 16
          %1042 = vsyncadd [#allocation8], %s1041
          %s1043 = smul.addr %s29, 16
          %s1044 = scalar_lea.hbm %s7, %s1043
          %s1046 = sshll.u32 [#allocation7], 4
          %s1047 = int_to_ptr.vmem [resolvable:$true] %s1046
          %1049 = dma.vmem_to_hbm [thread:$0]  %s1047, 16, %s1044, [#allocation8]
        $region60: #{tpu_custom_call.1} parent=39 // pred_fallthru
          _
        // Predicated region
        $region61: #{tpu_custom_call.1} parent=39 // pred_check
          %p1050 = pneg %p225
        $region62: #{tpu_custom_call.1} parent=39 // pred_check_branch
          %1052 = sbr.rel (%p1050) target = $region64
        $region63: #{tpu_custom_call.1} parent=39 // pred_region
          %s1054 = ssub.s32 16, 16
          %1055 = vsyncadd [#allocation8], %s1054
          %s1056 = smul.addr %s29, 16
          %s1057 = scalar_lea.hbm %s8, %s1056
          %s1059 = sshll.u32 [#allocation9], 4
          %s1060 = int_to_ptr.vmem [resolvable:$true] %s1059
          %1062 = dma.vmem_to_hbm [thread:$0]  %s1060, 16, %s1057, [#allocation8]
        $region64: #{tpu_custom_call.1} parent=39 // pred_fallthru
          _
        // Predicated region
        $region65: #{tpu_custom_call.1} parent=39 // pred_check
          %p1063 = pneg %p173
        $region66: #{tpu_custom_call.1} parent=39 // pred_check_branch
          %1065 = sbr.rel (%p1063) target = $region68
        $region67: #{tpu_custom_call.1} parent=39 // pred_region
          %1066 = dma.done [#allocation6], 16
        $region68: #{tpu_custom_call.1} parent=39 // pred_fallthru
          _
        // Predicated region
        $region69: #{tpu_custom_call.1} parent=39 // pred_check
          %p1067 = pneg %p199
        $region70: #{tpu_custom_call.1} parent=39 // pred_check_branch
          %1069 = sbr.rel (%p1067) target = $region72
        $region71: #{tpu_custom_call.1} parent=39 // pred_region
          %1070 = dma.done [#allocation8], 16
        $region72: #{tpu_custom_call.1} parent=39 // pred_fallthru
          _
        // Predicated region
        $region73: #{tpu_custom_call.1} parent=39 // pred_check
          %p1071 = pneg %p225
        $region74: #{tpu_custom_call.1} parent=39 // pred_check_branch
          %1073 = sbr.rel (%p1071) target = $region76
        $region75: #{tpu_custom_call.1} parent=39 // pred_region
          %1074 = dma.done [#allocation8], 16
        $region76: #{tpu_custom_call.1} parent=39 // pred_fallthru
          _
      $region40: #{tpu_custom_call.1} parent=5 // pred_fallthru
        _
      %p1075 = scmp.le.s32.totalorder 2, %s20
      // Predicated region
      $region77: #{tpu_custom_call.1} parent=5 // pred_check
        %p1076 = pneg %p1075
      $region78: #{tpu_custom_call.1} parent=5 // pred_check_branch
        %1078 = sbr.rel (%p1076) target = $region80
      $region79: #{tpu_custom_call.1} parent=5 // pred_region
        %s1079 = ssub.s32 %s20, 2
      $region80: #{tpu_custom_call.1} parent=5 // pred_fallthru
        _
    $region6: #{tpu_custom_call.1} parent=1 // loop_footer
      %s24 = sadd.s32 1, %s20
    $region7: #{tpu_custom_call.1} parent=1 // loop_footer_branch
      %19 = sbr.rel target = $region3
    $region8: #{tpu_custom_call.1} parent=1 // loop_exit
      _
    %1080 = vsyncpa [#allocation6], 1
    %s1081 = scalar_lea.sflag [#allocation6], 1
    %1082 = vsyncpa %s1081, 1
    %1083 = vsyncpa [#allocation8], 1

</llo_original>
